<compile_context>
chip_gen: v7x
topology: tpu7x:2x2x1
jax: 0.10.0
libtpu: 0.0.40
codegen_flags: <defaults>
</compile_context>

<pallas_src>
import jax
import jax.numpy as jnp
import numpy as np
from jax.experimental import pallas as pl
from jax.experimental.pallas import tpu as pltpu

PAD = 0  # lb.Constants.PAD


# ----------------------------- Pallas kernel -------------------------------
def lstm_kernel(len_ref, gx_ref, whh_ref, out_ref, hn_ref, cn_ref, h_sc, c_sc):
    """One grid step == one (batch block, time chunk) of the LSTM recurrence.

    len_ref : (Bb, 1)  int32   per-sequence lengths (0 for padded batch rows)
    gx_ref  : (Tc, Bb, 4H) f32 precomputed  x @ W_ih^T + b_ih + b_hh
    whh_ref : (H, 4H)  f32     recurrent weights, pre-transposed
    out_ref : (Tc, Bb, H) f32  unpacked (zero-padded) LSTM outputs
    hn_ref  : (1, Bb, H) f32   final hidden state
    cn_ref  : (1, Bb, H) f32   final cell state
    h_sc/c_sc : (Bb, H) f32    recurrent state carried across time chunks
    """
    c_idx = pl.program_id(1)          # time-chunk index (sequential axis)
    Tc = gx_ref.shape[0]
    H = h_sc.shape[-1]

    # hidden=None in the reference forward -> zero initial state (per batch block)
    @pl.when(c_idx == 0)
    def _():
        h_sc[...] = jnp.zeros_like(h_sc)
        c_sc[...] = jnp.zeros_like(c_sc)

    lens = len_ref[...]               # (Bb, 1), loaded once per chunk
    whh = whh_ref[...]                # (H, 4H), loaded once per chunk
    t0 = c_idx * Tc

    def step(tt, carry):
        h, c = carry
        # Only the serial part: recurrent matmul + precomputed input projection.
        gates = gx_ref[tt] + jnp.dot(h, whh, preferred_element_type=jnp.float32)
        i_g = jax.nn.sigmoid(gates[:, 0 * H:1 * H])
        f_g = jax.nn.sigmoid(gates[:, 1 * H:2 * H])
        g_g = jnp.tanh(gates[:, 2 * H:3 * H])
        o_g = jax.nn.sigmoid(gates[:, 3 * H:4 * H])
        c_new = f_g * c + i_g * g_g
        h_new = o_g * jnp.tanh(c_new)

        # packed-sequence semantics: freeze state / zero output past the length.
        valid = (t0 + tt) < lens      # (Bb, 1) bool
        h = jnp.where(valid, h_new, h)
        c = jnp.where(valid, c_new, c)
        out_ref[tt] = jnp.where(valid, h_new, 0.0).astype(out_ref.dtype)
        return h, c

    h, c = jax.lax.fori_loop(0, Tc, step, (h_sc[...], c_sc[...]), unroll=True)
    h_sc[...] = h
    c_sc[...] = c

    # hn/cn output blocks have a constant block index along the time axis, so
    # writing the current state every chunk leaves the final state in HBM.
    hn_ref[0] = h.astype(hn_ref.dtype)
    cn_ref[0] = c.astype(cn_ref.dtype)


def lstm_pallas(emb, lengths, w_ih_t, w_hh_t, bias, *, time_chunk=32,
                batch_block=None):
    """emb: (T, B, D) f32; lengths: (B,) int32; weights pre-transposed."""
    T, B, D = emb.shape
    H = w_hh_t.shape[0]

    # ---- Hoisted input projection: one large MXU matmul for all timesteps ----
    gates_x = (jnp.dot(emb.reshape(T * B, D), w_ih_t,
                       preferred_element_type=jnp.float32)
               + bias).reshape(T, B, 4 * H)

    # ---- Pad batch to a sublane multiple (8) and time to a chunk multiple ----
    B_pad = -(-B // 8) * 8
    Tc = int(min(time_chunk, T))
    T_pad = -(-T // Tc) * Tc
    Bb = B_pad if batch_block is None else int(batch_block)
    assert B_pad % Bb == 0

    gx = jnp.zeros((T_pad, B_pad, 4 * H), jnp.float32).at[:T, :B].set(gates_x)
    lens = jnp.zeros((B_pad, 1), jnp.int32).at[:B, 0].set(
        lengths.astype(jnp.int32))

    nb = B_pad // Bb
    nc = T_pad // Tc

    outputs, h_n, c_n = pl.pallas_call(
        lstm_kernel,
        out_shape=(
            jax.ShapeDtypeStruct((T_pad, B_pad, H), jnp.float32),  # outputs
            jax.ShapeDtypeStruct((1, B_pad, H), jnp.float32),      # h_n
            jax.ShapeDtypeStruct((1, B_pad, H), jnp.float32),      # c_n
        ),
        grid_spec=pltpu.PrefetchScalarGridSpec(
            num_scalar_prefetch=0,
            grid=(nb, nc),
            in_specs=[
                pl.BlockSpec((Bb, 1), lambda b, c: (b, 0)),            # lengths
                pl.BlockSpec((Tc, Bb, 4 * H), lambda b, c: (c, b, 0)),  # gates_x
                pl.BlockSpec((H, 4 * H), lambda b, c: (0, 0)),          # W_hh^T
            ],
            out_specs=[
                pl.BlockSpec((Tc, Bb, H), lambda b, c: (c, b, 0)),
                pl.BlockSpec((1, Bb, H), lambda b, c: (0, b, 0)),
                pl.BlockSpec((1, Bb, H), lambda b, c: (0, b, 0)),
            ],
            scratch_shapes=[
                pltpu.VMEM((Bb, H), jnp.float32),   # h state
                pltpu.VMEM((Bb, H), jnp.float32),   # c state
            ],
        ),
        compiler_params=pltpu.CompilerParams(
            # batch blocks are independent (megacore on v7x); time is serial.
            dimension_semantics=("parallel", "arbitrary")),
    )(lens, gx, w_hh_t)

    return outputs[:T, :B], h_n[:, :B], c_n[:, :B]


# ----------------------------- Encoder wrapper ------------------------------
def init_params(key, vocab_size, word_vec_size, hidden_size):
    k0, k1, k2, k3, k4 = jax.random.split(key, 5)
    scale = 0.1
    embedding = scale * jax.random.normal(k0, (vocab_size, word_vec_size), jnp.float32)
    embedding = embedding.at[PAD].set(0.0)   # padding_idx -> zero vector
    w_ih = scale * jax.random.normal(k1, (4 * hidden_size, word_vec_size), jnp.float32)
    w_hh = scale * jax.random.normal(k2, (4 * hidden_size, hidden_size), jnp.float32)
    b_ih = scale * jax.random.normal(k3, (4 * hidden_size,), jnp.float32)
    b_hh = scale * jax.random.normal(k4, (4 * hidden_size,), jnp.float32)
    return dict(embedding=embedding, w_ih=w_ih, w_hh=w_hh, b_ih=b_ih, b_hh=b_hh)


def encoder_forward(params, token_ids, lengths):
    """Mirrors Encoder.forward: returns ((h_n, c_n), outputs)."""
    # Embedding lookup (gather) done in plain JAX as glue; PAD row is zero.
    emb = jnp.take(params["embedding"], token_ids, axis=0)   # (T, B, D)
    w_ih_t = params["w_ih"].T                                # (D, 4H)
    w_hh_t = params["w_hh"].T                                # (H, 4H)
    bias = (params["b_ih"] + params["b_hh"]).reshape(1, -1)  # (1, 4H)
    outputs, h_n, c_n = lstm_pallas(emb, lengths, w_ih_t, w_hh_t, bias)
    return (h_n, c_n), outputs


# ------------------------- pure-JAX reference -------------------------------
def encoder_reference(params, token_ids, lengths):
    emb = jnp.take(params["embedding"], token_ids, axis=0)   # (T, B, D)
    T, B, D = emb.shape
    H = params["w_hh"].shape[1]
    w_ih_t = params["w_ih"].T
    w_hh_t = params["w_hh"].T
    bias = params["b_ih"] + params["b_hh"]

    def step(carry, inp):
        h, c = carry
        x_t, t = inp
        gates = x_t @ w_ih_t + h @ w_hh_t + bias
        i_g = jax.nn.sigmoid(gates[:, 0 * H:1 * H])
        f_g = jax.nn.sigmoid(gates[:, 1 * H:2 * H])
        g_g = jnp.tanh(gates[:, 2 * H:3 * H])
        o_g = jax.nn.sigmoid(gates[:, 3 * H:4 * H])
        c_new = f_g * c + i_g * g_g
        h_new = o_g * jnp.tanh(c_new)
        valid = (t < lengths)[:, None]
        h = jnp.where(valid, h_new, h)
        c = jnp.where(valid, c_new, c)
        out = jnp.where(valid, h_new, 0.0)
        return (h, c), out

    init = (jnp.zeros((B, H), jnp.float32), jnp.zeros((B, H), jnp.float32))
    (h_n, c_n), outs = jax.lax.scan(step, init, (emb, jnp.arange(T)))
    return (h_n[None], c_n[None]), outs


# --------------------------------- main --------------------------------------
if __name__ == "__main__":
    # Small shapes consistent with the module: layers=1, brnn=False,
    # word_vec_size=16, rnn_size(=hidden)=32, vocab=20, seq=8, batch=4.
    T, B, VOCAB, D, H = 8, 4, 20, 16, 32

    key = jax.random.PRNGKey(0)
    pkey, tkey = jax.random.split(key)
    params = init_params(pkey, VOCAB, D, H)

    # Descending lengths (as pack_padded_sequence requires) and PAD-filled tails.
    lengths = jnp.array([8, 6, 4, 2], dtype=jnp.int32)
    token_ids = jax.random.randint(tkey, (T, B), 1, VOCAB, dtype=jnp.int32)
    time_idx = jnp.arange(T)[:, None]
    token_ids = jnp.where(time_idx < lengths[None, :], token_ids, PAD)

    (h_n, c_n), outputs = jax.jit(encoder_forward)(params, token_ids, lengths)
    jax.block_until_ready(outputs)

    (h_ref, c_ref), out_ref = encoder_reference(params, token_ids, lengths)
    np.testing.assert_allclose(np.asarray(outputs), np.asarray(out_ref), rtol=1e-5, atol=1e-5)
    np.testing.assert_allclose(np.asarray(h_n), np.asarray(h_ref), rtol=1e-5, atol=1e-5)
    np.testing.assert_allclose(np.asarray(c_n), np.asarray(c_ref), rtol=1e-5, atol=1e-5)

    assert outputs.shape == (T, B, H)
    assert h_n.shape == (1, B, H) and c_n.shape == (1, B, H)
    print("KERNEL_OK")
</pallas_src>

<mosaic_0001>
module attributes {stable_mosaic.version = 11 : i64} {
  func.func @lstm_kernel(%arg0: i32, %arg1: i32, %arg2: memref<8x1xi32, #tpu.memory_space<vmem>>, %arg3: memref<8x8x128xf32, #tpu.memory_space<vmem>>, %arg4: memref<32x128xf32, #tpu.memory_space<vmem>>, %arg5: memref<8x8x32xf32, #tpu.memory_space<vmem>>, %arg6: memref<1x8x32xf32, #tpu.memory_space<vmem>>, %arg7: memref<1x8x32xf32, #tpu.memory_space<vmem>>, %arg8: memref<8x32xf32, #tpu.memory_space<vmem>>, %arg9: memref<8x32xf32, #tpu.memory_space<vmem>>) attributes {dimension_semantics = [#tpu.dimension_semantics<parallel>, #tpu.dimension_semantics<arbitrary>], iteration_bounds = array<i64: 1, 1>, scalar_prefetch = 0 : i64, scratch_operands = 2 : i64, tpu.core_type = #tpu.core_type<tc>, window_params = [{transform_indices = @transform_0, window_bounds = array<i64: 8, 1>}, {transform_indices = @transform_1, window_bounds = array<i64: 8, 8, 128>}, {pipeline_mode = #tpu.pipeline_mode<synchronous>, transform_indices = @transform_2, window_bounds = array<i64: 32, 128>}, {transform_indices = @transform_3, window_bounds = array<i64: 8, 8, 32>}, {transform_indices = @transform_4, window_bounds = array<i64: 1, 8, 32>}, {transform_indices = @transform_5, window_bounds = array<i64: 1, 8, 32>}]} {
    %c0_i32 = arith.constant 0 : i32
    %0 = arith.cmpi eq, %arg1, %c0_i32 : i32
    %1 = arith.extui %0 : i1 to i32
    %c0_i32_0 = arith.constant 0 : i32
    %2 = arith.cmpi ne, %1, %c0_i32_0 : i32
    scf.if %2 {
      %cst_91 = arith.constant 0.000000e+00 : f32
      %392 = vector.broadcast %cst_91 : f32 to vector<8x32xf32>
      %c0_92 = arith.constant 0 : index
      %c0_93 = arith.constant 0 : index
      %393 = vector.load %arg8[%c0_92, %c0_93] : memref<8x32xf32, #tpu.memory_space<vmem>>, vector<8x32xf32>
      tpu.vector_store %arg8[%c0_92, %c0_93], %392 {strides = array<i32>} : memref<8x32xf32, #tpu.memory_space<vmem>>, vector<8x32xf32>,
      %cst_94 = arith.constant 0.000000e+00 : f32
      %394 = vector.broadcast %cst_94 : f32 to vector<8x32xf32>
      %c0_95 = arith.constant 0 : index
      %c0_96 = arith.constant 0 : index
      %395 = vector.load %arg9[%c0_95, %c0_96] : memref<8x32xf32, #tpu.memory_space<vmem>>, vector<8x32xf32>
      tpu.vector_store %arg9[%c0_95, %c0_96], %394 {strides = array<i32>} : memref<8x32xf32, #tpu.memory_space<vmem>>, vector<8x32xf32>,
    } else {
    }
    %c0 = arith.constant 0 : index
    %c0_1 = arith.constant 0 : index
    %3 = vector.load %arg2[%c0, %c0_1] : memref<8x1xi32, #tpu.memory_space<vmem>>, vector<8x1xi32>
    %c0_2 = arith.constant 0 : index
    %c0_3 = arith.constant 0 : index
    %4 = vector.load %arg4[%c0_2, %c0_3] : memref<32x128xf32, #tpu.memory_space<vmem>>, vector<32x128xf32>
    %c8_i32 = arith.constant 8 : i32
    %5 = arith.muli %arg1, %c8_i32 : i32
    %c0_4 = arith.constant 0 : index
    %c0_5 = arith.constant 0 : index
    %6 = vector.load %arg8[%c0_4, %c0_5] : memref<8x32xf32, #tpu.memory_space<vmem>>, vector<8x32xf32>
    %c0_6 = arith.constant 0 : index
    %c0_7 = arith.constant 0 : index
    %7 = vector.load %arg9[%c0_6, %c0_7] : memref<8x32xf32, #tpu.memory_space<vmem>>, vector<8x32xf32>
    %c0_i32_8 = arith.constant 0 : i32
    %8 = arith.index_cast %c0_i32_8 : i32 to index
    %c0_9 = arith.constant 0 : index
    %c0_10 = arith.constant 0 : index
    %9 = vector.load %arg3[%8, %c0_9, %c0_10] : memref<8x8x128xf32, #tpu.memory_space<vmem>>, vector<1x8x128xf32>
    %10 = vector.shape_cast %9 : vector<1x8x128xf32> to vector<8x128xf32>
    %cst = arith.constant dense<0.000000e+00> : vector<8x128xf32>
    %11 = tpu.matmul %6, %4, %cst {dimension_numbers = #tpu.dot_dimension_numbers<[1], [0], [0], [1], [0, 0, 1, 1], [], []>} : vector<8x32xf32>, vector<32x128xf32>, vector<8x128xf32> -> vector<8x128xf32>
    %12 = arith.addf %10, %11 : vector<8x128xf32>
    %13 = vector.extract_strided_slice %12 {offsets = [0, 0], sizes = [8, 32], strides = [1, 1]} : vector<8x128xf32> to vector<8x32xf32>
    %14 = arith.negf %13 : vector<8x32xf32>
    %15 = math.exp %14 : vector<8x32xf32>
    %cst_11 = arith.constant 1.000000e+00 : f32
    %16 = vector.broadcast %cst_11 : f32 to vector<8x32xf32>
    %17 = arith.addf %16, %15 : vector<8x32xf32>
    %18 = arith.divf %16, %17 : vector<8x32xf32>
    %19 = vector.extract_strided_slice %12 {offsets = [0, 32], sizes = [8, 32], strides = [1, 1]} : vector<8x128xf32> to vector<8x32xf32>
    %20 = arith.negf %19 : vector<8x32xf32>
    %21 = math.exp %20 : vector<8x32xf32>
    %cst_12 = arith.constant 1.000000e+00 : f32
    %22 = vector.broadcast %cst_12 : f32 to vector<8x32xf32>
    %23 = arith.addf %22, %21 : vector<8x32xf32>
    %24 = arith.divf %22, %23 : vector<8x32xf32>
    %25 = vector.extract_strided_slice %12 {offsets = [0, 64], sizes = [8, 32], strides = [1, 1]} : vector<8x128xf32> to vector<8x32xf32>
    %26 = math.tanh %25 : vector<8x32xf32>
    %27 = vector.extract_strided_slice %12 {offsets = [0, 96], sizes = [8, 32], strides = [1, 1]} : vector<8x128xf32> to vector<8x32xf32>
    %28 = arith.negf %27 : vector<8x32xf32>
    %29 = math.exp %28 : vector<8x32xf32>
    %cst_13 = arith.constant 1.000000e+00 : f32
    %30 = vector.broadcast %cst_13 : f32 to vector<8x32xf32>
    %31 = arith.addf %30, %29 : vector<8x32xf32>
    %32 = arith.divf %30, %31 : vector<8x32xf32>
    %33 = arith.mulf %24, %7 : vector<8x32xf32>
    %34 = arith.mulf %18, %26 : vector<8x32xf32>
    %35 = arith.addf %33, %34 : vector<8x32xf32>
    %36 = math.tanh %35 : vector<8x32xf32>
    %37 = arith.mulf %32, %36 : vector<8x32xf32>
    %38 = arith.addi %5, %c0_i32_8 : i32
    %39 = vector.broadcast %38 : i32 to vector<8x1xi32>
    %40 = arith.cmpi slt, %39, %3 : vector<8x1xi32>
    %41 = vector.shape_cast %40 : vector<8x1xi1> to vector<8x1xi1>
    %42 = vector.broadcast %41 : vector<8x1xi1> to vector<8x32xi1>
    %43 = arith.select %42, %37, %6 : vector<8x32xi1>, vector<8x32xf32>
    %44 = vector.shape_cast %40 : vector<8x1xi1> to vector<8x1xi1>
    %45 = vector.broadcast %44 : vector<8x1xi1> to vector<8x32xi1>
    %46 = arith.select %45, %35, %7 : vector<8x32xi1>, vector<8x32xf32>
    %cst_14 = arith.constant 0.000000e+00 : f32
    %47 = vector.shape_cast %40 : vector<8x1xi1> to vector<8x1xi1>
    %48 = vector.broadcast %47 : vector<8x1xi1> to vector<8x32xi1>
    %49 = vector.broadcast %cst_14 : f32 to vector<8x32xf32>
    %50 = arith.select %48, %37, %49 : vector<8x32xi1>, vector<8x32xf32>
    %51 = arith.index_cast %c0_i32_8 : i32 to index
    %c0_15 = arith.constant 0 : index
    %c0_16 = arith.constant 0 : index
    %52 = vector.load %arg5[%51, %c0_15, %c0_16] : memref<8x8x32xf32, #tpu.memory_space<vmem>>, vector<1x8x32xf32>
    %53 = vector.shape_cast %52 : vector<1x8x32xf32> to vector<8x32xf32>
    %54 = vector.shape_cast %50 : vector<8x32xf32> to vector<1x8x32xf32>
    tpu.vector_store %arg5[%51, %c0_15, %c0_16], %54 {strides = array<i32>} : memref<8x8x32xf32, #tpu.memory_space<vmem>>, vector<1x8x32xf32>,
    %c1_i32 = arith.constant 1 : i32
    %55 = arith.index_cast %c1_i32 : i32 to index
    %c0_17 = arith.constant 0 : index
    %c0_18 = arith.constant 0 : index
    %56 = vector.load %arg3[%55, %c0_17, %c0_18] : memref<8x8x128xf32, #tpu.memory_space<vmem>>, vector<1x8x128xf32>
    %57 = vector.shape_cast %56 : vector<1x8x128xf32> to vector<8x128xf32>
    %cst_19 = arith.constant dense<0.000000e+00> : vector<8x128xf32>
    %58 = tpu.matmul %43, %4, %cst_19 {dimension_numbers = #tpu.dot_dimension_numbers<[1], [0], [0], [1], [0, 0, 1, 1], [], []>} : vector<8x32xf32>, vector<32x128xf32>, vector<8x128xf32> -> vector<8x128xf32>
    %59 = arith.addf %57, %58 : vector<8x128xf32>
    %60 = vector.extract_strided_slice %59 {offsets = [0, 0], sizes = [8, 32], strides = [1, 1]} : vector<8x128xf32> to vector<8x32xf32>
    %61 = arith.negf %60 : vector<8x32xf32>
    %62 = math.exp %61 : vector<8x32xf32>
    %cst_20 = arith.constant 1.000000e+00 : f32
    %63 = vector.broadcast %cst_20 : f32 to vector<8x32xf32>
    %64 = arith.addf %63, %62 : vector<8x32xf32>
    %65 = arith.divf %63, %64 : vector<8x32xf32>
    %66 = vector.extract_strided_slice %59 {offsets = [0, 32], sizes = [8, 32], strides = [1, 1]} : vector<8x128xf32> to vector<8x32xf32>
    %67 = arith.negf %66 : vector<8x32xf32>
    %68 = math.exp %67 : vector<8x32xf32>
    %cst_21 = arith.constant 1.000000e+00 : f32
    %69 = vector.broadcast %cst_21 : f32 to vector<8x32xf32>
    %70 = arith.addf %69, %68 : vector<8x32xf32>
    %71 = arith.divf %69, %70 : vector<8x32xf32>
    %72 = vector.extract_strided_slice %59 {offsets = [0, 64], sizes = [8, 32], strides = [1, 1]} : vector<8x128xf32> to vector<8x32xf32>
    %73 = math.tanh %72 : vector<8x32xf32>
    %74 = vector.extract_strided_slice %59 {offsets = [0, 96], sizes = [8, 32], strides = [1, 1]} : vector<8x128xf32> to vector<8x32xf32>
    %75 = arith.negf %74 : vector<8x32xf32>
    %76 = math.exp %75 : vector<8x32xf32>
    %cst_22 = arith.constant 1.000000e+00 : f32
    %77 = vector.broadcast %cst_22 : f32 to vector<8x32xf32>
    %78 = arith.addf %77, %76 : vector<8x32xf32>
    %79 = arith.divf %77, %78 : vector<8x32xf32>
    %80 = arith.mulf %71, %46 : vector<8x32xf32>
    %81 = arith.mulf %65, %73 : vector<8x32xf32>
    %82 = arith.addf %80, %81 : vector<8x32xf32>
    %83 = math.tanh %82 : vector<8x32xf32>
    %84 = arith.mulf %79, %83 : vector<8x32xf32>
    %85 = arith.addi %5, %c1_i32 : i32
    %86 = vector.broadcast %85 : i32 to vector<8x1xi32>
    %87 = arith.cmpi slt, %86, %3 : vector<8x1xi32>
    %88 = vector.shape_cast %87 : vector<8x1xi1> to vector<8x1xi1>
    %89 = vector.broadcast %88 : vector<8x1xi1> to vector<8x32xi1>
    %90 = arith.select %89, %84, %43 : vector<8x32xi1>, vector<8x32xf32>
    %91 = vector.shape_cast %87 : vector<8x1xi1> to vector<8x1xi1>
    %92 = vector.broadcast %91 : vector<8x1xi1> to vector<8x32xi1>
    %93 = arith.select %92, %82, %46 : vector<8x32xi1>, vector<8x32xf32>
    %cst_23 = arith.constant 0.000000e+00 : f32
    %94 = vector.shape_cast %87 : vector<8x1xi1> to vector<8x1xi1>
    %95 = vector.broadcast %94 : vector<8x1xi1> to vector<8x32xi1>
    %96 = vector.broadcast %cst_23 : f32 to vector<8x32xf32>
    %97 = arith.select %95, %84, %96 : vector<8x32xi1>, vector<8x32xf32>
    %98 = arith.index_cast %c1_i32 : i32 to index
    %c0_24 = arith.constant 0 : index
    %c0_25 = arith.constant 0 : index
    %99 = vector.load %arg5[%98, %c0_24, %c0_25] : memref<8x8x32xf32, #tpu.memory_space<vmem>>, vector<1x8x32xf32>
    %100 = vector.shape_cast %99 : vector<1x8x32xf32> to vector<8x32xf32>
    %101 = vector.shape_cast %97 : vector<8x32xf32> to vector<1x8x32xf32>
    tpu.vector_store %arg5[%98, %c0_24, %c0_25], %101 {strides = array<i32>} : memref<8x8x32xf32, #tpu.memory_space<vmem>>, vector<1x8x32xf32>,
    %c2_i32 = arith.constant 2 : i32
    %102 = arith.index_cast %c2_i32 : i32 to index
    %c0_26 = arith.constant 0 : index
    %c0_27 = arith.constant 0 : index
    %103 = vector.load %arg3[%102, %c0_26, %c0_27] : memref<8x8x128xf32, #tpu.memory_space<vmem>>, vector<1x8x128xf32>
    %104 = vector.shape_cast %103 : vector<1x8x128xf32> to vector<8x128xf32>
    %cst_28 = arith.constant dense<0.000000e+00> : vector<8x128xf32>
    %105 = tpu.matmul %90, %4, %cst_28 {dimension_numbers = #tpu.dot_dimension_numbers<[1], [0], [0], [1], [0, 0, 1, 1], [], []>} : vector<8x32xf32>, vector<32x128xf32>, vector<8x128xf32> -> vector<8x128xf32>
    %106 = arith.addf %104, %105 : vector<8x128xf32>
    %107 = vector.extract_strided_slice %106 {offsets = [0, 0], sizes = [8, 32], strides = [1, 1]} : vector<8x128xf32> to vector<8x32xf32>
    %108 = arith.negf %107 : vector<8x32xf32>
    %109 = math.exp %108 : vector<8x32xf32>
    %cst_29 = arith.constant 1.000000e+00 : f32
    %110 = vector.broadcast %cst_29 : f32 to vector<8x32xf32>
    %111 = arith.addf %110, %109 : vector<8x32xf32>
    %112 = arith.divf %110, %111 : vector<8x32xf32>
    %113 = vector.extract_strided_slice %106 {offsets = [0, 32], sizes = [8, 32], strides = [1, 1]} : vector<8x128xf32> to vector<8x32xf32>
    %114 = arith.negf %113 : vector<8x32xf32>
    %115 = math.exp %114 : vector<8x32xf32>
    %cst_30 = arith.constant 1.000000e+00 : f32
    %116 = vector.broadcast %cst_30 : f32 to vector<8x32xf32>
    %117 = arith.addf %116, %115 : vector<8x32xf32>
    %118 = arith.divf %116, %117 : vector<8x32xf32>
    %119 = vector.extract_strided_slice %106 {offsets = [0, 64], sizes = [8, 32], strides = [1, 1]} : vector<8x128xf32> to vector<8x32xf32>
    %120 = math.tanh %119 : vector<8x32xf32>
    %121 = vector.extract_strided_slice %106 {offsets = [0, 96], sizes = [8, 32], strides = [1, 1]} : vector<8x128xf32> to vector<8x32xf32>
    %122 = arith.negf %121 : vector<8x32xf32>
    %123 = math.exp %122 : vector<8x32xf32>
    %cst_31 = arith.constant 1.000000e+00 : f32
    %124 = vector.broadcast %cst_31 : f32 to vector<8x32xf32>
    %125 = arith.addf %124, %123 : vector<8x32xf32>
    %126 = arith.divf %124, %125 : vector<8x32xf32>
    %127 = arith.mulf %118, %93 : vector<8x32xf32>
    %128 = arith.mulf %112, %120 : vector<8x32xf32>
    %129 = arith.addf %127, %128 : vector<8x32xf32>
    %130 = math.tanh %129 : vector<8x32xf32>
    %131 = arith.mulf %126, %130 : vector<8x32xf32>
    %132 = arith.addi %5, %c2_i32 : i32
    %133 = vector.broadcast %132 : i32 to vector<8x1xi32>
    %134 = arith.cmpi slt, %133, %3 : vector<8x1xi32>
    %135 = vector.shape_cast %134 : vector<8x1xi1> to vector<8x1xi1>
    %136 = vector.broadcast %135 : vector<8x1xi1> to vector<8x32xi1>
    %137 = arith.select %136, %131, %90 : vector<8x32xi1>, vector<8x32xf32>
    %138 = vector.shape_cast %134 : vector<8x1xi1> to vector<8x1xi1>
    %139 = vector.broadcast %138 : vector<8x1xi1> to vector<8x32xi1>
    %140 = arith.select %139, %129, %93 : vector<8x32xi1>, vector<8x32xf32>
    %cst_32 = arith.constant 0.000000e+00 : f32
    %141 = vector.shape_cast %134 : vector<8x1xi1> to vector<8x1xi1>
    %142 = vector.broadcast %141 : vector<8x1xi1> to vector<8x32xi1>
    %143 = vector.broadcast %cst_32 : f32 to vector<8x32xf32>
    %144 = arith.select %142, %131, %143 : vector<8x32xi1>, vector<8x32xf32>
    %145 = arith.index_cast %c2_i32 : i32 to index
    %c0_33 = arith.constant 0 : index
    %c0_34 = arith.constant 0 : index
    %146 = vector.load %arg5[%145, %c0_33, %c0_34] : memref<8x8x32xf32, #tpu.memory_space<vmem>>, vector<1x8x32xf32>
    %147 = vector.shape_cast %146 : vector<1x8x32xf32> to vector<8x32xf32>
    %148 = vector.shape_cast %144 : vector<8x32xf32> to vector<1x8x32xf32>
    tpu.vector_store %arg5[%145, %c0_33, %c0_34], %148 {strides = array<i32>} : memref<8x8x32xf32, #tpu.memory_space<vmem>>, vector<1x8x32xf32>,
    %c3_i32 = arith.constant 3 : i32
    %149 = arith.index_cast %c3_i32 : i32 to index
    %c0_35 = arith.constant 0 : index
    %c0_36 = arith.constant 0 : index
    %150 = vector.load %arg3[%149, %c0_35, %c0_36] : memref<8x8x128xf32, #tpu.memory_space<vmem>>, vector<1x8x128xf32>
    %151 = vector.shape_cast %150 : vector<1x8x128xf32> to vector<8x128xf32>
    %cst_37 = arith.constant dense<0.000000e+00> : vector<8x128xf32>
    %152 = tpu.matmul %137, %4, %cst_37 {dimension_numbers = #tpu.dot_dimension_numbers<[1], [0], [0], [1], [0, 0, 1, 1], [], []>} : vector<8x32xf32>, vector<32x128xf32>, vector<8x128xf32> -> vector<8x128xf32>
    %153 = arith.addf %151, %152 : vector<8x128xf32>
    %154 = vector.extract_strided_slice %153 {offsets = [0, 0], sizes = [8, 32], strides = [1, 1]} : vector<8x128xf32> to vector<8x32xf32>
    %155 = arith.negf %154 : vector<8x32xf32>
    %156 = math.exp %155 : vector<8x32xf32>
    %cst_38 = arith.constant 1.000000e+00 : f32
    %157 = vector.broadcast %cst_38 : f32 to vector<8x32xf32>
    %158 = arith.addf %157, %156 : vector<8x32xf32>
    %159 = arith.divf %157, %158 : vector<8x32xf32>
    %160 = vector.extract_strided_slice %153 {offsets = [0, 32], sizes = [8, 32], strides = [1, 1]} : vector<8x128xf32> to vector<8x32xf32>
    %161 = arith.negf %160 : vector<8x32xf32>
    %162 = math.exp %161 : vector<8x32xf32>
    %cst_39 = arith.constant 1.000000e+00 : f32
    %163 = vector.broadcast %cst_39 : f32 to vector<8x32xf32>
    %164 = arith.addf %163, %162 : vector<8x32xf32>
    %165 = arith.divf %163, %164 : vector<8x32xf32>
    %166 = vector.extract_strided_slice %153 {offsets = [0, 64], sizes = [8, 32], strides = [1, 1]} : vector<8x128xf32> to vector<8x32xf32>
    %167 = math.tanh %166 : vector<8x32xf32>
    %168 = vector.extract_strided_slice %153 {offsets = [0, 96], sizes = [8, 32], strides = [1, 1]} : vector<8x128xf32> to vector<8x32xf32>
    %169 = arith.negf %168 : vector<8x32xf32>
    %170 = math.exp %169 : vector<8x32xf32>
    %cst_40 = arith.constant 1.000000e+00 : f32
    %171 = vector.broadcast %cst_40 : f32 to vector<8x32xf32>
    %172 = arith.addf %171, %170 : vector<8x32xf32>
    %173 = arith.divf %171, %172 : vector<8x32xf32>
    %174 = arith.mulf %165, %140 : vector<8x32xf32>
    %175 = arith.mulf %159, %167 : vector<8x32xf32>
    %176 = arith.addf %174, %175 : vector<8x32xf32>
    %177 = math.tanh %176 : vector<8x32xf32>
    %178 = arith.mulf %173, %177 : vector<8x32xf32>
    %179 = arith.addi %5, %c3_i32 : i32
    %180 = vector.broadcast %179 : i32 to vector<8x1xi32>
    %181 = arith.cmpi slt, %180, %3 : vector<8x1xi32>
    %182 = vector.shape_cast %181 : vector<8x1xi1> to vector<8x1xi1>
    %183 = vector.broadcast %182 : vector<8x1xi1> to vector<8x32xi1>
    %184 = arith.select %183, %178, %137 : vector<8x32xi1>, vector<8x32xf32>
    %185 = vector.shape_cast %181 : vector<8x1xi1> to vector<8x1xi1>
    %186 = vector.broadcast %185 : vector<8x1xi1> to vector<8x32xi1>
    %187 = arith.select %186, %176, %140 : vector<8x32xi1>, vector<8x32xf32>
    %cst_41 = arith.constant 0.000000e+00 : f32
    %188 = vector.shape_cast %181 : vector<8x1xi1> to vector<8x1xi1>
    %189 = vector.broadcast %188 : vector<8x1xi1> to vector<8x32xi1>
    %190 = vector.broadcast %cst_41 : f32 to vector<8x32xf32>
    %191 = arith.select %189, %178, %190 : vector<8x32xi1>, vector<8x32xf32>
    %192 = arith.index_cast %c3_i32 : i32 to index
    %c0_42 = arith.constant 0 : index
    %c0_43 = arith.constant 0 : index
    %193 = vector.load %arg5[%192, %c0_42, %c0_43] : memref<8x8x32xf32, #tpu.memory_space<vmem>>, vector<1x8x32xf32>
    %194 = vector.shape_cast %193 : vector<1x8x32xf32> to vector<8x32xf32>
    %195 = vector.shape_cast %191 : vector<8x32xf32> to vector<1x8x32xf32>
    tpu.vector_store %arg5[%192, %c0_42, %c0_43], %195 {strides = array<i32>} : memref<8x8x32xf32, #tpu.memory_space<vmem>>, vector<1x8x32xf32>,
    %c4_i32 = arith.constant 4 : i32
    %196 = arith.index_cast %c4_i32 : i32 to index
    %c0_44 = arith.constant 0 : index
    %c0_45 = arith.constant 0 : index
    %197 = vector.load %arg3[%196, %c0_44, %c0_45] : memref<8x8x128xf32, #tpu.memory_space<vmem>>, vector<1x8x128xf32>
    %198 = vector.shape_cast %197 : vector<1x8x128xf32> to vector<8x128xf32>
    %cst_46 = arith.constant dense<0.000000e+00> : vector<8x128xf32>
    %199 = tpu.matmul %184, %4, %cst_46 {dimension_numbers = #tpu.dot_dimension_numbers<[1], [0], [0], [1], [0, 0, 1, 1], [], []>} : vector<8x32xf32>, vector<32x128xf32>, vector<8x128xf32> -> vector<8x128xf32>
    %200 = arith.addf %198, %199 : vector<8x128xf32>
    %201 = vector.extract_strided_slice %200 {offsets = [0, 0], sizes = [8, 32], strides = [1, 1]} : vector<8x128xf32> to vector<8x32xf32>
    %202 = arith.negf %201 : vector<8x32xf32>
    %203 = math.exp %202 : vector<8x32xf32>
    %cst_47 = arith.constant 1.000000e+00 : f32
    %204 = vector.broadcast %cst_47 : f32 to vector<8x32xf32>
    %205 = arith.addf %204, %203 : vector<8x32xf32>
    %206 = arith.divf %204, %205 : vector<8x32xf32>
    %207 = vector.extract_strided_slice %200 {offsets = [0, 32], sizes = [8, 32], strides = [1, 1]} : vector<8x128xf32> to vector<8x32xf32>
    %208 = arith.negf %207 : vector<8x32xf32>
    %209 = math.exp %208 : vector<8x32xf32>
    %cst_48 = arith.constant 1.000000e+00 : f32
    %210 = vector.broadcast %cst_48 : f32 to vector<8x32xf32>
    %211 = arith.addf %210, %209 : vector<8x32xf32>
    %212 = arith.divf %210, %211 : vector<8x32xf32>
    %213 = vector.extract_strided_slice %200 {offsets = [0, 64], sizes = [8, 32], strides = [1, 1]} : vector<8x128xf32> to vector<8x32xf32>
    %214 = math.tanh %213 : vector<8x32xf32>
    %215 = vector.extract_strided_slice %200 {offsets = [0, 96], sizes = [8, 32], strides = [1, 1]} : vector<8x128xf32> to vector<8x32xf32>
    %216 = arith.negf %215 : vector<8x32xf32>
    %217 = math.exp %216 : vector<8x32xf32>
    %cst_49 = arith.constant 1.000000e+00 : f32
    %218 = vector.broadcast %cst_49 : f32 to vector<8x32xf32>
    %219 = arith.addf %218, %217 : vector<8x32xf32>
    %220 = arith.divf %218, %219 : vector<8x32xf32>
    %221 = arith.mulf %212, %187 : vector<8x32xf32>
    %222 = arith.mulf %206, %214 : vector<8x32xf32>
    %223 = arith.addf %221, %222 : vector<8x32xf32>
    %224 = math.tanh %223 : vector<8x32xf32>
    %225 = arith.mulf %220, %224 : vector<8x32xf32>
    %226 = arith.addi %5, %c4_i32 : i32
    %227 = vector.broadcast %226 : i32 to vector<8x1xi32>
    %228 = arith.cmpi slt, %227, %3 : vector<8x1xi32>
    %229 = vector.shape_cast %228 : vector<8x1xi1> to vector<8x1xi1>
    %230 = vector.broadcast %229 : vector<8x1xi1> to vector<8x32xi1>
    %231 = arith.select %230, %225, %184 : vector<8x32xi1>, vector<8x32xf32>
    %232 = vector.shape_cast %228 : vector<8x1xi1> to vector<8x1xi1>
    %233 = vector.broadcast %232 : vector<8x1xi1> to vector<8x32xi1>
    %234 = arith.select %233, %223, %187 : vector<8x32xi1>, vector<8x32xf32>
    %cst_50 = arith.constant 0.000000e+00 : f32
    %235 = vector.shape_cast %228 : vector<8x1xi1> to vector<8x1xi1>
    %236 = vector.broadcast %235 : vector<8x1xi1> to vector<8x32xi1>
    %237 = vector.broadcast %cst_50 : f32 to vector<8x32xf32>
    %238 = arith.select %236, %225, %237 : vector<8x32xi1>, vector<8x32xf32>
    %239 = arith.index_cast %c4_i32 : i32 to index
    %c0_51 = arith.constant 0 : index
    %c0_52 = arith.constant 0 : index
    %240 = vector.load %arg5[%239, %c0_51, %c0_52] : memref<8x8x32xf32, #tpu.memory_space<vmem>>, vector<1x8x32xf32>
    %241 = vector.shape_cast %240 : vector<1x8x32xf32> to vector<8x32xf32>
    %242 = vector.shape_cast %238 : vector<8x32xf32> to vector<1x8x32xf32>
    tpu.vector_store %arg5[%239, %c0_51, %c0_52], %242 {strides = array<i32>} : memref<8x8x32xf32, #tpu.memory_space<vmem>>, vector<1x8x32xf32>,
    %c5_i32 = arith.constant 5 : i32
    %243 = arith.index_cast %c5_i32 : i32 to index
    %c0_53 = arith.constant 0 : index
    %c0_54 = arith.constant 0 : index
    %244 = vector.load %arg3[%243, %c0_53, %c0_54] : memref<8x8x128xf32, #tpu.memory_space<vmem>>, vector<1x8x128xf32>
    %245 = vector.shape_cast %244 : vector<1x8x128xf32> to vector<8x128xf32>
    %cst_55 = arith.constant dense<0.000000e+00> : vector<8x128xf32>
    %246 = tpu.matmul %231, %4, %cst_55 {dimension_numbers = #tpu.dot_dimension_numbers<[1], [0], [0], [1], [0, 0, 1, 1], [], []>} : vector<8x32xf32>, vector<32x128xf32>, vector<8x128xf32> -> vector<8x128xf32>
    %247 = arith.addf %245, %246 : vector<8x128xf32>
    %248 = vector.extract_strided_slice %247 {offsets = [0, 0], sizes = [8, 32], strides = [1, 1]} : vector<8x128xf32> to vector<8x32xf32>
    %249 = arith.negf %248 : vector<8x32xf32>
    %250 = math.exp %249 : vector<8x32xf32>
    %cst_56 = arith.constant 1.000000e+00 : f32
    %251 = vector.broadcast %cst_56 : f32 to vector<8x32xf32>
    %252 = arith.addf %251, %250 : vector<8x32xf32>
    %253 = arith.divf %251, %252 : vector<8x32xf32>
    %254 = vector.extract_strided_slice %247 {offsets = [0, 32], sizes = [8, 32], strides = [1, 1]} : vector<8x128xf32> to vector<8x32xf32>
    %255 = arith.negf %254 : vector<8x32xf32>
    %256 = math.exp %255 : vector<8x32xf32>
    %cst_57 = arith.constant 1.000000e+00 : f32
    %257 = vector.broadcast %cst_57 : f32 to vector<8x32xf32>
    %258 = arith.addf %257, %256 : vector<8x32xf32>
    %259 = arith.divf %257, %258 : vector<8x32xf32>
    %260 = vector.extract_strided_slice %247 {offsets = [0, 64], sizes = [8, 32], strides = [1, 1]} : vector<8x128xf32> to vector<8x32xf32>
    %261 = math.tanh %260 : vector<8x32xf32>
    %262 = vector.extract_strided_slice %247 {offsets = [0, 96], sizes = [8, 32], strides = [1, 1]} : vector<8x128xf32> to vector<8x32xf32>
    %263 = arith.negf %262 : vector<8x32xf32>
    %264 = math.exp %263 : vector<8x32xf32>
    %cst_58 = arith.constant 1.000000e+00 : f32
    %265 = vector.broadcast %cst_58 : f32 to vector<8x32xf32>
    %266 = arith.addf %265, %264 : vector<8x32xf32>
    %267 = arith.divf %265, %266 : vector<8x32xf32>
    %268 = arith.mulf %259, %234 : vector<8x32xf32>
    %269 = arith.mulf %253, %261 : vector<8x32xf32>
    %270 = arith.addf %268, %269 : vector<8x32xf32>
    %271 = math.tanh %270 : vector<8x32xf32>
    %272 = arith.mulf %267, %271 : vector<8x32xf32>
    %273 = arith.addi %5, %c5_i32 : i32
    %274 = vector.broadcast %273 : i32 to vector<8x1xi32>
    %275 = arith.cmpi slt, %274, %3 : vector<8x1xi32>
    %276 = vector.shape_cast %275 : vector<8x1xi1> to vector<8x1xi1>
    %277 = vector.broadcast %276 : vector<8x1xi1> to vector<8x32xi1>
    %278 = arith.select %277, %272, %231 : vector<8x32xi1>, vector<8x32xf32>
    %279 = vector.shape_cast %275 : vector<8x1xi1> to vector<8x1xi1>
    %280 = vector.broadcast %279 : vector<8x1xi1> to vector<8x32xi1>
    %281 = arith.select %280, %270, %234 : vector<8x32xi1>, vector<8x32xf32>
    %cst_59 = arith.constant 0.000000e+00 : f32
    %282 = vector.shape_cast %275 : vector<8x1xi1> to vector<8x1xi1>
    %283 = vector.broadcast %282 : vector<8x1xi1> to vector<8x32xi1>
    %284 = vector.broadcast %cst_59 : f32 to vector<8x32xf32>
    %285 = arith.select %283, %272, %284 : vector<8x32xi1>, vector<8x32xf32>
    %286 = arith.index_cast %c5_i32 : i32 to index
    %c0_60 = arith.constant 0 : index
    %c0_61 = arith.constant 0 : index
    %287 = vector.load %arg5[%286, %c0_60, %c0_61] : memref<8x8x32xf32, #tpu.memory_space<vmem>>, vector<1x8x32xf32>
    %288 = vector.shape_cast %287 : vector<1x8x32xf32> to vector<8x32xf32>
    %289 = vector.shape_cast %285 : vector<8x32xf32> to vector<1x8x32xf32>
    tpu.vector_store %arg5[%286, %c0_60, %c0_61], %289 {strides = array<i32>} : memref<8x8x32xf32, #tpu.memory_space<vmem>>, vector<1x8x32xf32>,
    %c6_i32 = arith.constant 6 : i32
    %290 = arith.index_cast %c6_i32 : i32 to index
    %c0_62 = arith.constant 0 : index
    %c0_63 = arith.constant 0 : index
    %291 = vector.load %arg3[%290, %c0_62, %c0_63] : memref<8x8x128xf32, #tpu.memory_space<vmem>>, vector<1x8x128xf32>
    %292 = vector.shape_cast %291 : vector<1x8x128xf32> to vector<8x128xf32>
    %cst_64 = arith.constant dense<0.000000e+00> : vector<8x128xf32>
    %293 = tpu.matmul %278, %4, %cst_64 {dimension_numbers = #tpu.dot_dimension_numbers<[1], [0], [0], [1], [0, 0, 1, 1], [], []>} : vector<8x32xf32>, vector<32x128xf32>, vector<8x128xf32> -> vector<8x128xf32>
    %294 = arith.addf %292, %293 : vector<8x128xf32>
    %295 = vector.extract_strided_slice %294 {offsets = [0, 0], sizes = [8, 32], strides = [1, 1]} : vector<8x128xf32> to vector<8x32xf32>
    %296 = arith.negf %295 : vector<8x32xf32>
    %297 = math.exp %296 : vector<8x32xf32>
    %cst_65 = arith.constant 1.000000e+00 : f32
    %298 = vector.broadcast %cst_65 : f32 to vector<8x32xf32>
    %299 = arith.addf %298, %297 : vector<8x32xf32>
    %300 = arith.divf %298, %299 : vector<8x32xf32>
    %301 = vector.extract_strided_slice %294 {offsets = [0, 32], sizes = [8, 32], strides = [1, 1]} : vector<8x128xf32> to vector<8x32xf32>
    %302 = arith.negf %301 : vector<8x32xf32>
    %303 = math.exp %302 : vector<8x32xf32>
    %cst_66 = arith.constant 1.000000e+00 : f32
    %304 = vector.broadcast %cst_66 : f32 to vector<8x32xf32>
    %305 = arith.addf %304, %303 : vector<8x32xf32>
    %306 = arith.divf %304, %305 : vector<8x32xf32>
    %307 = vector.extract_strided_slice %294 {offsets = [0, 64], sizes = [8, 32], strides = [1, 1]} : vector<8x128xf32> to vector<8x32xf32>
    %308 = math.tanh %307 : vector<8x32xf32>
    %309 = vector.extract_strided_slice %294 {offsets = [0, 96], sizes = [8, 32], strides = [1, 1]} : vector<8x128xf32> to vector<8x32xf32>
    %310 = arith.negf %309 : vector<8x32xf32>
    %311 = math.exp %310 : vector<8x32xf32>
    %cst_67 = arith.constant 1.000000e+00 : f32
    %312 = vector.broadcast %cst_67 : f32 to vector<8x32xf32>
    %313 = arith.addf %312, %311 : vector<8x32xf32>
    %314 = arith.divf %312, %313 : vector<8x32xf32>
    %315 = arith.mulf %306, %281 : vector<8x32xf32>
    %316 = arith.mulf %300, %308 : vector<8x32xf32>
    %317 = arith.addf %315, %316 : vector<8x32xf32>
    %318 = math.tanh %317 : vector<8x32xf32>
    %319 = arith.mulf %314, %318 : vector<8x32xf32>
    %320 = arith.addi %5, %c6_i32 : i32
    %321 = vector.broadcast %320 : i32 to vector<8x1xi32>
    %322 = arith.cmpi slt, %321, %3 : vector<8x1xi32>
    %323 = vector.shape_cast %322 : vector<8x1xi1> to vector<8x1xi1>
    %324 = vector.broadcast %323 : vector<8x1xi1> to vector<8x32xi1>
    %325 = arith.select %324, %319, %278 : vector<8x32xi1>, vector<8x32xf32>
    %326 = vector.shape_cast %322 : vector<8x1xi1> to vector<8x1xi1>
    %327 = vector.broadcast %326 : vector<8x1xi1> to vector<8x32xi1>
    %328 = arith.select %327, %317, %281 : vector<8x32xi1>, vector<8x32xf32>
    %cst_68 = arith.constant 0.000000e+00 : f32
    %329 = vector.shape_cast %322 : vector<8x1xi1> to vector<8x1xi1>
    %330 = vector.broadcast %329 : vector<8x1xi1> to vector<8x32xi1>
    %331 = vector.broadcast %cst_68 : f32 to vector<8x32xf32>
    %332 = arith.select %330, %319, %331 : vector<8x32xi1>, vector<8x32xf32>
    %333 = arith.index_cast %c6_i32 : i32 to index
    %c0_69 = arith.constant 0 : index
    %c0_70 = arith.constant 0 : index
    %334 = vector.load %arg5[%333, %c0_69, %c0_70] : memref<8x8x32xf32, #tpu.memory_space<vmem>>, vector<1x8x32xf32>
    %335 = vector.shape_cast %334 : vector<1x8x32xf32> to vector<8x32xf32>
    %336 = vector.shape_cast %332 : vector<8x32xf32> to vector<1x8x32xf32>
    tpu.vector_store %arg5[%333, %c0_69, %c0_70], %336 {strides = array<i32>} : memref<8x8x32xf32, #tpu.memory_space<vmem>>, vector<1x8x32xf32>,
    %c7_i32 = arith.constant 7 : i32
    %337 = arith.index_cast %c7_i32 : i32 to index
    %c0_71 = arith.constant 0 : index
    %c0_72 = arith.constant 0 : index
    %338 = vector.load %arg3[%337, %c0_71, %c0_72] : memref<8x8x128xf32, #tpu.memory_space<vmem>>, vector<1x8x128xf32>
    %339 = vector.shape_cast %338 : vector<1x8x128xf32> to vector<8x128xf32>
    %cst_73 = arith.constant dense<0.000000e+00> : vector<8x128xf32>
    %340 = tpu.matmul %325, %4, %cst_73 {dimension_numbers = #tpu.dot_dimension_numbers<[1], [0], [0], [1], [0, 0, 1, 1], [], []>} : vector<8x32xf32>, vector<32x128xf32>, vector<8x128xf32> -> vector<8x128xf32>
    %341 = arith.addf %339, %340 : vector<8x128xf32>
    %342 = vector.extract_strided_slice %341 {offsets = [0, 0], sizes = [8, 32], strides = [1, 1]} : vector<8x128xf32> to vector<8x32xf32>
    %343 = arith.negf %342 : vector<8x32xf32>
    %344 = math.exp %343 : vector<8x32xf32>
    %cst_74 = arith.constant 1.000000e+00 : f32
    %345 = vector.broadcast %cst_74 : f32 to vector<8x32xf32>
    %346 = arith.addf %345, %344 : vector<8x32xf32>
    %347 = arith.divf %345, %346 : vector<8x32xf32>
    %348 = vector.extract_strided_slice %341 {offsets = [0, 32], sizes = [8, 32], strides = [1, 1]} : vector<8x128xf32> to vector<8x32xf32>
    %349 = arith.negf %348 : vector<8x32xf32>
    %350 = math.exp %349 : vector<8x32xf32>
    %cst_75 = arith.constant 1.000000e+00 : f32
    %351 = vector.broadcast %cst_75 : f32 to vector<8x32xf32>
    %352 = arith.addf %351, %350 : vector<8x32xf32>
    %353 = arith.divf %351, %352 : vector<8x32xf32>
    %354 = vector.extract_strided_slice %341 {offsets = [0, 64], sizes = [8, 32], strides = [1, 1]} : vector<8x128xf32> to vector<8x32xf32>
    %355 = math.tanh %354 : vector<8x32xf32>
    %356 = vector.extract_strided_slice %341 {offsets = [0, 96], sizes = [8, 32], strides = [1, 1]} : vector<8x128xf32> to vector<8x32xf32>
    %357 = arith.negf %356 : vector<8x32xf32>
    %358 = math.exp %357 : vector<8x32xf32>
    %cst_76 = arith.constant 1.000000e+00 : f32
    %359 = vector.broadcast %cst_76 : f32 to vector<8x32xf32>
    %360 = arith.addf %359, %358 : vector<8x32xf32>
    %361 = arith.divf %359, %360 : vector<8x32xf32>
    %362 = arith.mulf %353, %328 : vector<8x32xf32>
    %363 = arith.mulf %347, %355 : vector<8x32xf32>
    %364 = arith.addf %362, %363 : vector<8x32xf32>
    %365 = math.tanh %364 : vector<8x32xf32>
    %366 = arith.mulf %361, %365 : vector<8x32xf32>
    %367 = arith.addi %5, %c7_i32 : i32
    %368 = vector.broadcast %367 : i32 to vector<8x1xi32>
    %369 = arith.cmpi slt, %368, %3 : vector<8x1xi32>
    %370 = vector.shape_cast %369 : vector<8x1xi1> to vector<8x1xi1>
    %371 = vector.broadcast %370 : vector<8x1xi1> to vector<8x32xi1>
    %372 = arith.select %371, %366, %325 : vector<8x32xi1>, vector<8x32xf32>
    %373 = vector.shape_cast %369 : vector<8x1xi1> to vector<8x1xi1>
    %374 = vector.broadcast %373 : vector<8x1xi1> to vector<8x32xi1>
    %375 = arith.select %374, %364, %328 : vector<8x32xi1>, vector<8x32xf32>
    %cst_77 = arith.constant 0.000000e+00 : f32
    %376 = vector.shape_cast %369 : vector<8x1xi1> to vector<8x1xi1>
    %377 = vector.broadcast %376 : vector<8x1xi1> to vector<8x32xi1>
    %378 = vector.broadcast %cst_77 : f32 to vector<8x32xf32>
    %379 = arith.select %377, %366, %378 : vector<8x32xi1>, vector<8x32xf32>
    %380 = arith.index_cast %c7_i32 : i32 to index
    %c0_78 = arith.constant 0 : index
    %c0_79 = arith.constant 0 : index
    %381 = vector.load %arg5[%380, %c0_78, %c0_79] : memref<8x8x32xf32, #tpu.memory_space<vmem>>, vector<1x8x32xf32>
    %382 = vector.shape_cast %381 : vector<1x8x32xf32> to vector<8x32xf32>
    %383 = vector.shape_cast %379 : vector<8x32xf32> to vector<1x8x32xf32>
    tpu.vector_store %arg5[%380, %c0_78, %c0_79], %383 {strides = array<i32>} : memref<8x8x32xf32, #tpu.memory_space<vmem>>, vector<1x8x32xf32>,
    %c8_i32_80 = arith.constant 8 : i32
    %c0_81 = arith.constant 0 : index
    %c0_82 = arith.constant 0 : index
    %384 = vector.load %arg8[%c0_81, %c0_82] : memref<8x32xf32, #tpu.memory_space<vmem>>, vector<8x32xf32>
    tpu.vector_store %arg8[%c0_81, %c0_82], %372 {strides = array<i32>} : memref<8x32xf32, #tpu.memory_space<vmem>>, vector<8x32xf32>,
    %c0_83 = arith.constant 0 : index
    %c0_84 = arith.constant 0 : index
    %385 = vector.load %arg9[%c0_83, %c0_84] : memref<8x32xf32, #tpu.memory_space<vmem>>, vector<8x32xf32>
    tpu.vector_store %arg9[%c0_83, %c0_84], %375 {strides = array<i32>} : memref<8x32xf32, #tpu.memory_space<vmem>>, vector<8x32xf32>,
    %c0_85 = arith.constant 0 : index
    %c0_86 = arith.constant 0 : index
    %c0_87 = arith.constant 0 : index
    %386 = vector.load %arg6[%c0_85, %c0_86, %c0_87] : memref<1x8x32xf32, #tpu.memory_space<vmem>>, vector<1x8x32xf32>
    %387 = vector.shape_cast %386 : vector<1x8x32xf32> to vector<8x32xf32>
    %388 = vector.shape_cast %372 : vector<8x32xf32> to vector<1x8x32xf32>
    tpu.vector_store %arg6[%c0_85, %c0_86, %c0_87], %388 {strides = array<i32>} : memref<1x8x32xf32, #tpu.memory_space<vmem>>, vector<1x8x32xf32>,
    %c0_88 = arith.constant 0 : index
    %c0_89 = arith.constant 0 : index
    %c0_90 = arith.constant 0 : index
    %389 = vector.load %arg7[%c0_88, %c0_89, %c0_90] : memref<1x8x32xf32, #tpu.memory_space<vmem>>, vector<1x8x32xf32>
    %390 = vector.shape_cast %389 : vector<1x8x32xf32> to vector<8x32xf32>
    %391 = vector.shape_cast %375 : vector<8x32xf32> to vector<1x8x32xf32>
    tpu.vector_store %arg7[%c0_88, %c0_89, %c0_90], %391 {strides = array<i32>} : memref<1x8x32xf32, #tpu.memory_space<vmem>>, vector<1x8x32xf32>,
    return
  }
  func.func @transform_0(%arg0: i32, %arg1: i32) -> (i32, i32) {
    %c0_i32 = arith.constant 0 : i32
    %c0_i32_0 = arith.constant 0 : i32
    return %arg0, %c0_i32 : i32, i32
  }
  func.func @transform_1(%arg0: i32, %arg1: i32) -> (i32, i32, i32) {
    %c0_i32 = arith.constant 0 : i32
    %c0_i32_0 = arith.constant 0 : i32
    return %arg1, %arg0, %c0_i32 : i32, i32, i32
  }
  func.func @transform_2(%arg0: i32, %arg1: i32) -> (i32, i32) {
    %c0_i32 = arith.constant 0 : i32
    %c0_i32_0 = arith.constant 0 : i32
    %c0_i32_1 = arith.constant 0 : i32
    return %c0_i32, %c0_i32_0 : i32, i32
  }
  func.func @transform_3(%arg0: i32, %arg1: i32) -> (i32, i32, i32) {
    %c0_i32 = arith.constant 0 : i32
    %c0_i32_0 = arith.constant 0 : i32
    return %arg1, %arg0, %c0_i32 : i32, i32, i32
  }
  func.func @transform_4(%arg0: i32, %arg1: i32) -> (i32, i32, i32) {
    %c0_i32 = arith.constant 0 : i32
    %c0_i32_0 = arith.constant 0 : i32
    %c0_i32_1 = arith.constant 0 : i32
    return %c0_i32, %arg0, %c0_i32_0 : i32, i32, i32
  }
  func.func @transform_5(%arg0: i32, %arg1: i32) -> (i32, i32, i32) {
    %c0_i32 = arith.constant 0 : i32
    %c0_i32_0 = arith.constant 0 : i32
    %c0_i32_1 = arith.constant 0 : i32
    return %c0_i32, %arg0, %c0_i32_0 : i32, i32, i32
  }
}

</mosaic_0001>

<llo_original>
// kernel: encoder_forward.1
$region0: #{encoder_forward.1}
  #allocation0 [shape = 'u32[]', space=smem, size = 0x4, offset = 0x4, fixed_abs, tag = 'smem constant byte address 0x4 - core index']
  #allocation1 [shape = 'u32[144,128]{1,0:T(1,128)}', space=vmem, size = 0x12000, scoped, tag = 'internal scratch']
  #allocation2 [shape = 'f32[8,32]{1,0:T(8,128)}', space=vmem, size = 0x1000, scoped, tag = 'scratch operand']
  #allocation3 [shape = 'f32[8,32]{1,0:T(8,128)}', space=vmem, size = 0x1000, scoped, tag = 'scratch operand']
  %s0 = inlined_call_operand.vmem [shape: s32[8,1], index: 0, kind: input, shape index: {}]
  %s1 = inlined_call_operand.vmem [shape: f32[8,8,128], index: 1, kind: input, shape index: {}]
  %s2 = inlined_call_operand.vmem [shape: f32[32,128], index: 2, kind: input, shape index: {}]
  %s3 = inlined_call_operand.vmem [shape: f32[8,8,32], index: 3, kind: output, shape index: {0}]
  %s4 = inlined_call_operand.vmem [shape: f32[1,8,32], index: 4, kind: output, shape index: {1}]
  %s5 = inlined_call_operand.vmem [shape: f32[1,8,32], index: 5, kind: output, shape index: {2}]
  %6 = xla_tuple %s3, %s4, %s5
  %s7 = sld [smem:[#allocation0]]
  $region42: #{encoder_forward.1} parent=0
    _
  %s9 = ssub.s32 1, %s7
  %s10 = scalar_select 0, %s9, %s7
  // Predicated region
  $region2: #{encoder_forward.1} parent=0 // pred_check
    _
  $region3: #{encoder_forward.1} parent=0 // pred_check_branch
    %12 = sbr.rel (0) target = $region5
  $region4: #{encoder_forward.1} parent=0 // pred_region
    _
  $region5: #{encoder_forward.1} parent=0 // pred_fallthru
    _
  // Predicated region
  $region6: #{encoder_forward.1} parent=0 // pred_check
    _
  $region7: #{encoder_forward.1} parent=0 // pred_check_branch
    %14 = sbr.rel (0) target = $region9
  $region8: #{encoder_forward.1} parent=0 // pred_region
    _
  $region9: #{encoder_forward.1} parent=0 // pred_fallthru
    _
  // Predicated region
  $region10: #{encoder_forward.1} parent=0 // pred_check
    _
  $region11: #{encoder_forward.1} parent=0 // pred_check_branch
    %16 = sbr.rel (0) target = $region13
  $region12: #{encoder_forward.1} parent=0 // pred_region
    _
  $region13: #{encoder_forward.1} parent=0 // pred_fallthru
    _
  %p17 = scmp.eq.s32.totalorder 0, 0
  // Predicated region
  $region14: #{encoder_forward.1} parent=0 // pred_check
    %p18 = pneg %p17
  $region15: #{encoder_forward.1} parent=0 // pred_check_branch
    %20 = sbr.rel (%p18) target = $region17
  $region16: #{encoder_forward.1} parent=0 // pred_region
    %vm21 = vcmask 261120
    %22 = vst.msk [vmem:[#allocation2] sm:$0xff] %vm21, 0.0
    %23 = vst.msk [vmem:[#allocation3] sm:$0xff] %vm21, 0.0
  $region17: #{encoder_forward.1} parent=0 // pred_fallthru
    _
  %v24 = vld [vmem:[%s0] sm:$0xff]
  %v25 = vld [vmem:[%s2] sm:$0xff]
  %v26 = vld [vmem:[%s2 + $0x8] sm:$0xff]
  %v27 = vld [vmem:[%s2 + $0x10] sm:$0xff]
  %v28 = vld [vmem:[%s2 + $0x18] sm:$0xff]
  %s29 = smul.u32 0, 8
  %v30 = vld [vmem:[#allocation2] sm:$0xff]
  %v31 = vld [vmem:[#allocation3] sm:$0xff]
  %v32 = vld [vmem:[%s1] sm:$0xff]
  %vm33 = vcmask 261120
  %v35 = vsel %vm33, %v30, 0
  %37 = vmatprep.subr.mxu0 0.0
  %38 = vmatpush1.msra.mxu0 %v25
  %39 = vmatprep.subr.mxu0 0.0
  %40 = vmatpush1.msra.mxu0 %v26
  %41 = vmatprep.subr.mxu0 0.0
  %42 = vmatpush1.msra.mxu0 %v27
  %43 = vmatprep.subr.mxu0 0.0
  %44 = vmatpush1.msra.mxu0 %v28
  %45 = vmatprep.subr.mxu0 0.0
  %46 = vmatpush1.msra.mxu0 0.0
  %47 = vmatprep.subr.mxu0 0.0
  %48 = vmatpush1.msra.mxu0 0.0
  %49 = vmatprep.subr.mxu0 0.0
  %50 = vmatpush1.msra.mxu0 0.0
  %51 = vmatprep.subr.mxu0 0.0
  %52 = vmatpush1.msra.mxu0 0.0
  %53 = vmatprep.subr.mxu0 0.0
  %54 = vmatpush1.msra.mxu0 0.0
  %55 = vmatprep.subr.mxu0 0.0
  %56 = vmatpush1.msra.mxu0 0.0
  %57 = vmatprep.subr.mxu0 0.0
  %58 = vmatpush1.msra.mxu0 0.0
  %59 = vmatprep.subr.mxu0 0.0
  %60 = vmatpush1.msra.mxu0 0.0
  %61 = vmatprep.subr.mxu0 0.0
  %62 = vmatpush1.msra.mxu0 0.0
  %63 = vmatprep.subr.mxu0 0.0
  %64 = vmatpush1.msra.mxu0 0.0
  %65 = vmatprep.subr.mxu0 0.0
  %66 = vmatpush1.msra.mxu0 0.0
  %67 = vmatprep.subr.mxu0 0.0
  %68 = vmatpush1.msra.mxu0 0.0
  %69 = vmatprep.subr.mxu0 0.0
  %70 = vmatpush1.msra.mxu0 0.0
  %71 = vmatprep.subr.mxu0 0.0
  %72 = vmatpush1.msra.mxu0 0.0
  %73 = vmatprep.subr.mxu0 0.0
  %74 = vmatpush1.msra.mxu0 0.0
  %75 = vmatprep.subr.mxu0 0.0
  %76 = vmatpush1.msra.mxu0 0.0
  %77 = vmatprep.subr.mxu0 0.0
  %78 = vmatpush1.msra.mxu0 0.0
  %79 = vmatprep.subr.mxu0 0.0
  %80 = vmatpush1.msra.mxu0 0.0
  %81 = vmatprep.subr.mxu0 0.0
  %82 = vmatpush1.msra.mxu0 0.0
  %83 = vmatprep.subr.mxu0 0.0
  %84 = vmatpush1.msra.mxu0 0.0
  %85 = vmatprep.subr.mxu0 0.0
  %86 = vmatpush1.msra.mxu0 0.0
  %87 = vmatprep.subr.mxu0 0.0
  %88 = vmatpush1.msra.mxu0 0.0
  %89 = vmatprep.subr.mxu0 0.0
  %90 = vmatpush1.msra.mxu0 0.0
  %91 = vmatprep.subr.mxu0 0.0
  %92 = vmatpush1.msra.mxu0 0.0
  %93 = vmatprep.subr.mxu0 0.0
  %94 = vmatpush1.msra.mxu0 0.0
  %95 = vmatprep.subr.mxu0 0.0
  %96 = vmatpush1.msra.mxu0 0.0
  %97 = vmatprep.subr.mxu0 0.0
  %98 = vmatpush1.msra.mxu0 0.0
  %99 = vmatprep.subr.mxu0 0.0
  %100 = vmatpush1.msra.mxu0 0.0
  %101 = vmatprep.mubr.f32.mxu0 0.0
  %102 = vmatmul.mubr.f32.gmra.mrb[0].mxu0 %v35
  %v103 = vpop.f32.mrb[0].mxu0
  %v104 = vadd.f32 0.0, %v103
  %v105 = vpop.f32.mrb[0].mxu0
  %106 = vdwg.mxu0
  %v107 = vadd.f32 %v32, %v104
  %v108 = vxor.u32 %v107, 2147483648
  %v109 = vmul.f32 %v108, 1.442695
  %v110 = vpow.pop %v109
  %v111 = vadd.f32 %v110, 1.0
  %v112 = vrcp.pop %v111
  %v113 = vmul.f32 1.0, %v112
  %v114 = vtanh.pop %v107
  %116 = vrot.lane.b32.xlu0 %v31, 32
  %v117 = vpop.permute.xlu0 %116
  %v119 = vmul.f32 %v113, %v117
  %121 = vrot.lane.b32.xlu0 %v114, 64
  %v122 = vpop.permute.xlu0 %121
  %v124 = vmul.f32 %v113, %v122
  %126 = vrot.lane.b32.xlu0 %v124, 32
  %v127 = vpop.permute.xlu0 %126
  %v129 = vadd.f32 %v119, %v127
  %v130 = vtanh.pop %v129
  %132 = vrot.lane.b32.xlu0 %v130, 64
  %v133 = vpop.permute.xlu0 %132
  %v135 = vmul.f32 %v113, %v133
  %v136 = vstv %s29
  %vm137 = vcmp.lt.s32.totalorder %v136, %v24
  %v138 = vsel %vm137, 1, 0
  %139 = vset.pattern.permute.xlu0 0
  %140 = vperm.xlu0 %139, %v138
  %v141 = vpop.permute.xlu0 %140
  %vm142 = vcmp.eq.s32.totalorder %v141, 1
  %143 = vrot.lane.b32.xlu0 %v30, 96
  %v144 = vpop.permute.xlu0 %143
  %v146 = vsel %vm142, %v135, %v144
  %v147 = vsel %vm142, %v129, %v117
  %v148 = vsel %vm142, %v135, 0.0
  %150 = vrot.lane.b32.xlu0 %v148, 32
  %v151 = vpop.permute.xlu0 %150
  %153 = vst.msk [vmem:[%s3] sm:$0xff] %vm33, %v151
  %s154 = scalar_lea.vmem %s1, 8
  %v155 = vld [vmem:[%s154] sm:$0xff]
  %157 = vrot.lane.b32.xlu0 %v146, 32
  %v158 = vpop.permute.xlu0 %157
  %v159 = vsel %vm33, %v158, 0
  %161 = vmatprep.subr.mxu0 0.0
  %162 = vmatpush1.msra.mxu0 %v25
  %163 = vmatprep.subr.mxu0 0.0
  %164 = vmatpush1.msra.mxu0 %v26
  %165 = vmatprep.subr.mxu0 0.0
  %166 = vmatpush1.msra.mxu0 %v27
  %167 = vmatprep.subr.mxu0 0.0
  %168 = vmatpush1.msra.mxu0 %v28
  %169 = vmatprep.subr.mxu0 0.0
  %170 = vmatpush1.msra.mxu0 0.0
  %171 = vmatprep.subr.mxu0 0.0
  %172 = vmatpush1.msra.mxu0 0.0
  %173 = vmatprep.subr.mxu0 0.0
  %174 = vmatpush1.msra.mxu0 0.0
  %175 = vmatprep.subr.mxu0 0.0
  %176 = vmatpush1.msra.mxu0 0.0
  %177 = vmatprep.subr.mxu0 0.0
  %178 = vmatpush1.msra.mxu0 0.0
  %179 = vmatprep.subr.mxu0 0.0
  %180 = vmatpush1.msra.mxu0 0.0
  %181 = vmatprep.subr.mxu0 0.0
  %182 = vmatpush1.msra.mxu0 0.0
  %183 = vmatprep.subr.mxu0 0.0
  %184 = vmatpush1.msra.mxu0 0.0
  %185 = vmatprep.subr.mxu0 0.0
  %186 = vmatpush1.msra.mxu0 0.0
  %187 = vmatprep.subr.mxu0 0.0
  %188 = vmatpush1.msra.mxu0 0.0
  %189 = vmatprep.subr.mxu0 0.0
  %190 = vmatpush1.msra.mxu0 0.0
  %191 = vmatprep.subr.mxu0 0.0
  %192 = vmatpush1.msra.mxu0 0.0
  %193 = vmatprep.subr.mxu0 0.0
  %194 = vmatpush1.msra.mxu0 0.0
  %195 = vmatprep.subr.mxu0 0.0
  %196 = vmatpush1.msra.mxu0 0.0
  %197 = vmatprep.subr.mxu0 0.0
  %198 = vmatpush1.msra.mxu0 0.0
  %199 = vmatprep.subr.mxu0 0.0
  %200 = vmatpush1.msra.mxu0 0.0
  %201 = vmatprep.subr.mxu0 0.0
  %202 = vmatpush1.msra.mxu0 0.0
  %203 = vmatprep.subr.mxu0 0.0
  %204 = vmatpush1.msra.mxu0 0.0
  %205 = vmatprep.subr.mxu0 0.0
  %206 = vmatpush1.msra.mxu0 0.0
  %207 = vmatprep.subr.mxu0 0.0
  %208 = vmatpush1.msra.mxu0 0.0
  %209 = vmatprep.subr.mxu0 0.0
  %210 = vmatpush1.msra.mxu0 0.0
  %211 = vmatprep.subr.mxu0 0.0
  %212 = vmatpush1.msra.mxu0 0.0
  %213 = vmatprep.subr.mxu0 0.0
  %214 = vmatpush1.msra.mxu0 0.0
  %215 = vmatprep.subr.mxu0 0.0
  %216 = vmatpush1.msra.mxu0 0.0
  %217 = vmatprep.subr.mxu0 0.0
  %218 = vmatpush1.msra.mxu0 0.0
  %219 = vmatprep.subr.mxu0 0.0
  %220 = vmatpush1.msra.mxu0 0.0
  %221 = vmatprep.subr.mxu0 0.0
  %222 = vmatpush1.msra.mxu0 0.0
  %223 = vmatprep.subr.mxu0 0.0
  %224 = vmatpush1.msra.mxu0 0.0
  %225 = vmatprep.mubr.f32.mxu0 0.0
  %226 = vmatmul.mubr.f32.gmra.mrb[0].mxu0 %v159
  %v227 = vpop.f32.mrb[0].mxu0
  %v228 = vadd.f32 0.0, %v227
  %v229 = vpop.f32.mrb[0].mxu0
  %230 = vdwg.mxu0
  %v231 = vadd.f32 %v155, %v228
  %v232 = vxor.u32 %v231, 2147483648
  %v233 = vmul.f32 %v232, 1.442695
  %v234 = vpow.pop %v233
  %v235 = vadd.f32 %v234, 1.0
  %v236 = vrcp.pop %v235
  %v237 = vmul.f32 1.0, %v236
  %v238 = vtanh.pop %v231
  %v239 = vmul.f32 %v237, %v147
  %241 = vrot.lane.b32.xlu0 %v238, 64
  %v242 = vpop.permute.xlu0 %241
  %v244 = vmul.f32 %v237, %v242
  %246 = vrot.lane.b32.xlu0 %v244, 32
  %v247 = vpop.permute.xlu0 %246
  %v249 = vadd.f32 %v239, %v247
  %v250 = vtanh.pop %v249
  %252 = vrot.lane.b32.xlu0 %v250, 64
  %v253 = vpop.permute.xlu0 %252
  %v255 = vmul.f32 %v237, %v253
  %s256 = sadd.s32 %s29, 1
  %v257 = vstv %s256
  %vm258 = vcmp.lt.s32.totalorder %v257, %v24
  %v259 = vsel %vm258, 1, 0
  %260 = vset.pattern.permute.xlu0 0
  %261 = vperm.xlu0 %260, %v259
  %v262 = vpop.permute.xlu0 %261
  %vm263 = vcmp.eq.s32.totalorder %v262, 1
  %v264 = vsel %vm263, %v255, %v146
  %v265 = vsel %vm263, %v249, %v147
  %v266 = vsel %vm263, %v255, 0.0
  %268 = vrot.lane.b32.xlu0 %v266, 32
  %v269 = vpop.permute.xlu0 %268
  %s271 = scalar_lea.vmem %s3, 8
  %272 = vst.msk [vmem:[%s271] sm:$0xff] %vm33, %v269
  %s273 = scalar_lea.vmem %s1, 16
  %v274 = vld [vmem:[%s273] sm:$0xff]
  %276 = vrot.lane.b32.xlu0 %v264, 32
  %v277 = vpop.permute.xlu0 %276
  %v278 = vsel %vm33, %v277, 0
  %280 = vmatprep.subr.mxu0 0.0
  %281 = vmatpush1.msra.mxu0 %v25
  %282 = vmatprep.subr.mxu0 0.0
  %283 = vmatpush1.msra.mxu0 %v26
  %284 = vmatprep.subr.mxu0 0.0
  %285 = vmatpush1.msra.mxu0 %v27
  %286 = vmatprep.subr.mxu0 0.0
  %287 = vmatpush1.msra.mxu0 %v28
  %288 = vmatprep.subr.mxu0 0.0
  %289 = vmatpush1.msra.mxu0 0.0
  %290 = vmatprep.subr.mxu0 0.0
  %291 = vmatpush1.msra.mxu0 0.0
  %292 = vmatprep.subr.mxu0 0.0
  %293 = vmatpush1.msra.mxu0 0.0
  %294 = vmatprep.subr.mxu0 0.0
  %295 = vmatpush1.msra.mxu0 0.0
  %296 = vmatprep.subr.mxu0 0.0
  %297 = vmatpush1.msra.mxu0 0.0
  %298 = vmatprep.subr.mxu0 0.0
  %299 = vmatpush1.msra.mxu0 0.0
  %300 = vmatprep.subr.mxu0 0.0
  %301 = vmatpush1.msra.mxu0 0.0
  %302 = vmatprep.subr.mxu0 0.0
  %303 = vmatpush1.msra.mxu0 0.0
  %304 = vmatprep.subr.mxu0 0.0
  %305 = vmatpush1.msra.mxu0 0.0
  %306 = vmatprep.subr.mxu0 0.0
  %307 = vmatpush1.msra.mxu0 0.0
  %308 = vmatprep.subr.mxu0 0.0
  %309 = vmatpush1.msra.mxu0 0.0
  %310 = vmatprep.subr.mxu0 0.0
  %311 = vmatpush1.msra.mxu0 0.0
  %312 = vmatprep.subr.mxu0 0.0
  %313 = vmatpush1.msra.mxu0 0.0
  %314 = vmatprep.subr.mxu0 0.0
  %315 = vmatpush1.msra.mxu0 0.0
  %316 = vmatprep.subr.mxu0 0.0
  %317 = vmatpush1.msra.mxu0 0.0
  %318 = vmatprep.subr.mxu0 0.0
  %319 = vmatpush1.msra.mxu0 0.0
  %320 = vmatprep.subr.mxu0 0.0
  %321 = vmatpush1.msra.mxu0 0.0
  %322 = vmatprep.subr.mxu0 0.0
  %323 = vmatpush1.msra.mxu0 0.0
  %324 = vmatprep.subr.mxu0 0.0
  %325 = vmatpush1.msra.mxu0 0.0
  %326 = vmatprep.subr.mxu0 0.0
  %327 = vmatpush1.msra.mxu0 0.0
  %328 = vmatprep.subr.mxu0 0.0
  %329 = vmatpush1.msra.mxu0 0.0
  %330 = vmatprep.subr.mxu0 0.0
  %331 = vmatpush1.msra.mxu0 0.0
  %332 = vmatprep.subr.mxu0 0.0
  %333 = vmatpush1.msra.mxu0 0.0
  %334 = vmatprep.subr.mxu0 0.0
  %335 = vmatpush1.msra.mxu0 0.0
  %336 = vmatprep.subr.mxu0 0.0
  %337 = vmatpush1.msra.mxu0 0.0
  %338 = vmatprep.subr.mxu0 0.0
  %339 = vmatpush1.msra.mxu0 0.0
  %340 = vmatprep.subr.mxu0 0.0
  %341 = vmatpush1.msra.mxu0 0.0
  %342 = vmatprep.subr.mxu0 0.0
  %343 = vmatpush1.msra.mxu0 0.0
  %344 = vmatprep.mubr.f32.mxu0 0.0
  %345 = vmatmul.mubr.f32.gmra.mrb[0].mxu0 %v278
  %v346 = vpop.f32.mrb[0].mxu0
  %v347 = vadd.f32 0.0, %v346
  %v348 = vpop.f32.mrb[0].mxu0
  %349 = vdwg.mxu0
  %v350 = vadd.f32 %v274, %v347
  %v351 = vxor.u32 %v350, 2147483648
  %v352 = vmul.f32 %v351, 1.442695
  %v353 = vpow.pop %v352
  %v354 = vadd.f32 %v353, 1.0
  %v355 = vrcp.pop %v354
  %v356 = vmul.f32 1.0, %v355
  %v357 = vtanh.pop %v350
  %v358 = vmul.f32 %v356, %v265
  %360 = vrot.lane.b32.xlu0 %v357, 64
  %v361 = vpop.permute.xlu0 %360
  %v363 = vmul.f32 %v356, %v361
  %365 = vrot.lane.b32.xlu0 %v363, 32
  %v366 = vpop.permute.xlu0 %365
  %v368 = vadd.f32 %v358, %v366
  %v369 = vtanh.pop %v368
  %371 = vrot.lane.b32.xlu0 %v369, 64
  %v372 = vpop.permute.xlu0 %371
  %v374 = vmul.f32 %v356, %v372
  %s375 = sadd.s32 %s29, 2
  %v376 = vstv %s375
  %vm377 = vcmp.lt.s32.totalorder %v376, %v24
  %v378 = vsel %vm377, 1, 0
  %379 = vset.pattern.permute.xlu0 0
  %380 = vperm.xlu0 %379, %v378
  %v381 = vpop.permute.xlu0 %380
  %vm382 = vcmp.eq.s32.totalorder %v381, 1
  %v383 = vsel %vm382, %v374, %v264
  %v384 = vsel %vm382, %v368, %v265
  %v385 = vsel %vm382, %v374, 0.0
  %387 = vrot.lane.b32.xlu0 %v385, 32
  %v388 = vpop.permute.xlu0 %387
  %s390 = scalar_lea.vmem %s3, 16
  %391 = vst.msk [vmem:[%s390] sm:$0xff] %vm33, %v388
  %s392 = scalar_lea.vmem %s1, 24
  %v393 = vld [vmem:[%s392] sm:$0xff]
  %395 = vrot.lane.b32.xlu0 %v383, 32
  %v396 = vpop.permute.xlu0 %395
  %v397 = vsel %vm33, %v396, 0
  %399 = vmatprep.subr.mxu0 0.0
  %400 = vmatpush1.msra.mxu0 %v25
  %401 = vmatprep.subr.mxu0 0.0
  %402 = vmatpush1.msra.mxu0 %v26
  %403 = vmatprep.subr.mxu0 0.0
  %404 = vmatpush1.msra.mxu0 %v27
  %405 = vmatprep.subr.mxu0 0.0
  %406 = vmatpush1.msra.mxu0 %v28
  %407 = vmatprep.subr.mxu0 0.0
  %408 = vmatpush1.msra.mxu0 0.0
  %409 = vmatprep.subr.mxu0 0.0
  %410 = vmatpush1.msra.mxu0 0.0
  %411 = vmatprep.subr.mxu0 0.0
  %412 = vmatpush1.msra.mxu0 0.0
  %413 = vmatprep.subr.mxu0 0.0
  %414 = vmatpush1.msra.mxu0 0.0
  %415 = vmatprep.subr.mxu0 0.0
  %416 = vmatpush1.msra.mxu0 0.0
  %417 = vmatprep.subr.mxu0 0.0
  %418 = vmatpush1.msra.mxu0 0.0
  %419 = vmatprep.subr.mxu0 0.0
  %420 = vmatpush1.msra.mxu0 0.0
  %421 = vmatprep.subr.mxu0 0.0
  %422 = vmatpush1.msra.mxu0 0.0
  %423 = vmatprep.subr.mxu0 0.0
  %424 = vmatpush1.msra.mxu0 0.0
  %425 = vmatprep.subr.mxu0 0.0
  %426 = vmatpush1.msra.mxu0 0.0
  %427 = vmatprep.subr.mxu0 0.0
  %428 = vmatpush1.msra.mxu0 0.0
  %429 = vmatprep.subr.mxu0 0.0
  %430 = vmatpush1.msra.mxu0 0.0
  %431 = vmatprep.subr.mxu0 0.0
  %432 = vmatpush1.msra.mxu0 0.0
  %433 = vmatprep.subr.mxu0 0.0
  %434 = vmatpush1.msra.mxu0 0.0
  %435 = vmatprep.subr.mxu0 0.0
  %436 = vmatpush1.msra.mxu0 0.0
  %437 = vmatprep.subr.mxu0 0.0
  %438 = vmatpush1.msra.mxu0 0.0
  %439 = vmatprep.subr.mxu0 0.0
  %440 = vmatpush1.msra.mxu0 0.0
  %441 = vmatprep.subr.mxu0 0.0
  %442 = vmatpush1.msra.mxu0 0.0
  %443 = vmatprep.subr.mxu0 0.0
  %444 = vmatpush1.msra.mxu0 0.0
  %445 = vmatprep.subr.mxu0 0.0
  %446 = vmatpush1.msra.mxu0 0.0
  %447 = vmatprep.subr.mxu0 0.0
  %448 = vmatpush1.msra.mxu0 0.0
  %449 = vmatprep.subr.mxu0 0.0
  %450 = vmatpush1.msra.mxu0 0.0
  %451 = vmatprep.subr.mxu0 0.0
  %452 = vmatpush1.msra.mxu0 0.0
  %453 = vmatprep.subr.mxu0 0.0
  %454 = vmatpush1.msra.mxu0 0.0
  %455 = vmatprep.subr.mxu0 0.0
  %456 = vmatpush1.msra.mxu0 0.0
  %457 = vmatprep.subr.mxu0 0.0
  %458 = vmatpush1.msra.mxu0 0.0
  %459 = vmatprep.subr.mxu0 0.0
  %460 = vmatpush1.msra.mxu0 0.0
  %461 = vmatprep.subr.mxu0 0.0
  %462 = vmatpush1.msra.mxu0 0.0
  %463 = vmatprep.mubr.f32.mxu0 0.0
  %464 = vmatmul.mubr.f32.gmra.mrb[0].mxu0 %v397
  %v465 = vpop.f32.mrb[0].mxu0
  %v466 = vadd.f32 0.0, %v465
  %v467 = vpop.f32.mrb[0].mxu0
  %468 = vdwg.mxu0
  %v469 = vadd.f32 %v393, %v466
  %v470 = vxor.u32 %v469, 2147483648
  %v471 = vmul.f32 %v470, 1.442695
  %v472 = vpow.pop %v471
  %v473 = vadd.f32 %v472, 1.0
  %v474 = vrcp.pop %v473
  %v475 = vmul.f32 1.0, %v474
  %v476 = vtanh.pop %v469
  %v477 = vmul.f32 %v475, %v384
  %479 = vrot.lane.b32.xlu0 %v476, 64
  %v480 = vpop.permute.xlu0 %479
  %v482 = vmul.f32 %v475, %v480
  %484 = vrot.lane.b32.xlu0 %v482, 32
  %v485 = vpop.permute.xlu0 %484
  %v487 = vadd.f32 %v477, %v485
  %v488 = vtanh.pop %v487
  %490 = vrot.lane.b32.xlu0 %v488, 64
  %v491 = vpop.permute.xlu0 %490
  %v493 = vmul.f32 %v475, %v491
  %s494 = sadd.s32 %s29, 3
  %v495 = vstv %s494
  %vm496 = vcmp.lt.s32.totalorder %v495, %v24
  %v497 = vsel %vm496, 1, 0
  %498 = vset.pattern.permute.xlu0 0
  %499 = vperm.xlu0 %498, %v497
  %v500 = vpop.permute.xlu0 %499
  %vm501 = vcmp.eq.s32.totalorder %v500, 1
  %v502 = vsel %vm501, %v493, %v383
  %v503 = vsel %vm501, %v487, %v384
  %v504 = vsel %vm501, %v493, 0.0
  %506 = vrot.lane.b32.xlu0 %v504, 32
  %v507 = vpop.permute.xlu0 %506
  %s509 = scalar_lea.vmem %s3, 24
  %510 = vst.msk [vmem:[%s509] sm:$0xff] %vm33, %v507
  %s511 = scalar_lea.vmem %s1, 32
  %v512 = vld [vmem:[%s511] sm:$0xff]
  %514 = vrot.lane.b32.xlu0 %v502, 32
  %v515 = vpop.permute.xlu0 %514
  %v516 = vsel %vm33, %v515, 0
  %518 = vmatprep.subr.mxu0 0.0
  %519 = vmatpush1.msra.mxu0 %v25
  %520 = vmatprep.subr.mxu0 0.0
  %521 = vmatpush1.msra.mxu0 %v26
  %522 = vmatprep.subr.mxu0 0.0
  %523 = vmatpush1.msra.mxu0 %v27
  %524 = vmatprep.subr.mxu0 0.0
  %525 = vmatpush1.msra.mxu0 %v28
  %526 = vmatprep.subr.mxu0 0.0
  %527 = vmatpush1.msra.mxu0 0.0
  %528 = vmatprep.subr.mxu0 0.0
  %529 = vmatpush1.msra.mxu0 0.0
  %530 = vmatprep.subr.mxu0 0.0
  %531 = vmatpush1.msra.mxu0 0.0
  %532 = vmatprep.subr.mxu0 0.0
  %533 = vmatpush1.msra.mxu0 0.0
  %534 = vmatprep.subr.mxu0 0.0
  %535 = vmatpush1.msra.mxu0 0.0
  %536 = vmatprep.subr.mxu0 0.0
  %537 = vmatpush1.msra.mxu0 0.0
  %538 = vmatprep.subr.mxu0 0.0
  %539 = vmatpush1.msra.mxu0 0.0
  %540 = vmatprep.subr.mxu0 0.0
  %541 = vmatpush1.msra.mxu0 0.0
  %542 = vmatprep.subr.mxu0 0.0
  %543 = vmatpush1.msra.mxu0 0.0
  %544 = vmatprep.subr.mxu0 0.0
  %545 = vmatpush1.msra.mxu0 0.0
  %546 = vmatprep.subr.mxu0 0.0
  %547 = vmatpush1.msra.mxu0 0.0
  %548 = vmatprep.subr.mxu0 0.0
  %549 = vmatpush1.msra.mxu0 0.0
  %550 = vmatprep.subr.mxu0 0.0
  %551 = vmatpush1.msra.mxu0 0.0
  %552 = vmatprep.subr.mxu0 0.0
  %553 = vmatpush1.msra.mxu0 0.0
  %554 = vmatprep.subr.mxu0 0.0
  %555 = vmatpush1.msra.mxu0 0.0
  %556 = vmatprep.subr.mxu0 0.0
  %557 = vmatpush1.msra.mxu0 0.0
  %558 = vmatprep.subr.mxu0 0.0
  %559 = vmatpush1.msra.mxu0 0.0
  %560 = vmatprep.subr.mxu0 0.0
  %561 = vmatpush1.msra.mxu0 0.0
  %562 = vmatprep.subr.mxu0 0.0
  %563 = vmatpush1.msra.mxu0 0.0
  %564 = vmatprep.subr.mxu0 0.0
  %565 = vmatpush1.msra.mxu0 0.0
  %566 = vmatprep.subr.mxu0 0.0
  %567 = vmatpush1.msra.mxu0 0.0
  %568 = vmatprep.subr.mxu0 0.0
  %569 = vmatpush1.msra.mxu0 0.0
  %570 = vmatprep.subr.mxu0 0.0
  %571 = vmatpush1.msra.mxu0 0.0
  %572 = vmatprep.subr.mxu0 0.0
  %573 = vmatpush1.msra.mxu0 0.0
  %574 = vmatprep.subr.mxu0 0.0
  %575 = vmatpush1.msra.mxu0 0.0
  %576 = vmatprep.subr.mxu0 0.0
  %577 = vmatpush1.msra.mxu0 0.0
  %578 = vmatprep.subr.mxu0 0.0
  %579 = vmatpush1.msra.mxu0 0.0
  %580 = vmatprep.subr.mxu0 0.0
  %581 = vmatpush1.msra.mxu0 0.0
  %582 = vmatprep.mubr.f32.mxu0 0.0
  %583 = vmatmul.mubr.f32.gmra.mrb[0].mxu0 %v516
  %v584 = vpop.f32.mrb[0].mxu0
  %v585 = vadd.f32 0.0, %v584
  %v586 = vpop.f32.mrb[0].mxu0
  %587 = vdwg.mxu0
  %v588 = vadd.f32 %v512, %v585
  %v589 = vxor.u32 %v588, 2147483648
  %v590 = vmul.f32 %v589, 1.442695
  %v591 = vpow.pop %v590
  %v592 = vadd.f32 %v591, 1.0
  %v593 = vrcp.pop %v592
  %v594 = vmul.f32 1.0, %v593
  %v595 = vtanh.pop %v588
  %v596 = vmul.f32 %v594, %v503
  %598 = vrot.lane.b32.xlu0 %v595, 64
  %v599 = vpop.permute.xlu0 %598
  %v601 = vmul.f32 %v594, %v599
  %603 = vrot.lane.b32.xlu0 %v601, 32
  %v604 = vpop.permute.xlu0 %603
  %v606 = vadd.f32 %v596, %v604
  %v607 = vtanh.pop %v606
  %609 = vrot.lane.b32.xlu0 %v607, 64
  %v610 = vpop.permute.xlu0 %609
  %v612 = vmul.f32 %v594, %v610
  %s613 = sadd.s32 %s29, 4
  %v614 = vstv %s613
  %vm615 = vcmp.lt.s32.totalorder %v614, %v24
  %v616 = vsel %vm615, 1, 0
  %617 = vset.pattern.permute.xlu0 0
  %618 = vperm.xlu0 %617, %v616
  %v619 = vpop.permute.xlu0 %618
  %vm620 = vcmp.eq.s32.totalorder %v619, 1
  %v621 = vsel %vm620, %v612, %v502
  %v622 = vsel %vm620, %v606, %v503
  %v623 = vsel %vm620, %v612, 0.0
  %625 = vrot.lane.b32.xlu0 %v623, 32
  %v626 = vpop.permute.xlu0 %625
  %s628 = scalar_lea.vmem %s3, 32
  %629 = vst.msk [vmem:[%s628] sm:$0xff] %vm33, %v626
  %s630 = scalar_lea.vmem %s1, 40
  %v631 = vld [vmem:[%s630] sm:$0xff]
  %633 = vrot.lane.b32.xlu0 %v621, 32
  %v634 = vpop.permute.xlu0 %633
  %v635 = vsel %vm33, %v634, 0
  %637 = vmatprep.subr.mxu0 0.0
  %638 = vmatpush1.msra.mxu0 %v25
  %639 = vmatprep.subr.mxu0 0.0
  %640 = vmatpush1.msra.mxu0 %v26
  %641 = vmatprep.subr.mxu0 0.0
  %642 = vmatpush1.msra.mxu0 %v27
  %643 = vmatprep.subr.mxu0 0.0
  %644 = vmatpush1.msra.mxu0 %v28
  %645 = vmatprep.subr.mxu0 0.0
  %646 = vmatpush1.msra.mxu0 0.0
  %647 = vmatprep.subr.mxu0 0.0
  %648 = vmatpush1.msra.mxu0 0.0
  %649 = vmatprep.subr.mxu0 0.0
  %650 = vmatpush1.msra.mxu0 0.0
  %651 = vmatprep.subr.mxu0 0.0
  %652 = vmatpush1.msra.mxu0 0.0
  %653 = vmatprep.subr.mxu0 0.0
  %654 = vmatpush1.msra.mxu0 0.0
  %655 = vmatprep.subr.mxu0 0.0
  %656 = vmatpush1.msra.mxu0 0.0
  %657 = vmatprep.subr.mxu0 0.0
  %658 = vmatpush1.msra.mxu0 0.0
  %659 = vmatprep.subr.mxu0 0.0
  %660 = vmatpush1.msra.mxu0 0.0
  %661 = vmatprep.subr.mxu0 0.0
  %662 = vmatpush1.msra.mxu0 0.0
  %663 = vmatprep.subr.mxu0 0.0
  %664 = vmatpush1.msra.mxu0 0.0
  %665 = vmatprep.subr.mxu0 0.0
  %666 = vmatpush1.msra.mxu0 0.0
  %667 = vmatprep.subr.mxu0 0.0
  %668 = vmatpush1.msra.mxu0 0.0
  %669 = vmatprep.subr.mxu0 0.0
  %670 = vmatpush1.msra.mxu0 0.0
  %671 = vmatprep.subr.mxu0 0.0
  %672 = vmatpush1.msra.mxu0 0.0
  %673 = vmatprep.subr.mxu0 0.0
  %674 = vmatpush1.msra.mxu0 0.0
  %675 = vmatprep.subr.mxu0 0.0
  %676 = vmatpush1.msra.mxu0 0.0
  %677 = vmatprep.subr.mxu0 0.0
  %678 = vmatpush1.msra.mxu0 0.0
  %679 = vmatprep.subr.mxu0 0.0
  %680 = vmatpush1.msra.mxu0 0.0
  %681 = vmatprep.subr.mxu0 0.0
  %682 = vmatpush1.msra.mxu0 0.0
  %683 = vmatprep.subr.mxu0 0.0
  %684 = vmatpush1.msra.mxu0 0.0
  %685 = vmatprep.subr.mxu0 0.0
  %686 = vmatpush1.msra.mxu0 0.0
  %687 = vmatprep.subr.mxu0 0.0
  %688 = vmatpush1.msra.mxu0 0.0
  %689 = vmatprep.subr.mxu0 0.0
  %690 = vmatpush1.msra.mxu0 0.0
  %691 = vmatprep.subr.mxu0 0.0
  %692 = vmatpush1.msra.mxu0 0.0
  %693 = vmatprep.subr.mxu0 0.0
  %694 = vmatpush1.msra.mxu0 0.0
  %695 = vmatprep.subr.mxu0 0.0
  %696 = vmatpush1.msra.mxu0 0.0
  %697 = vmatprep.subr.mxu0 0.0
  %698 = vmatpush1.msra.mxu0 0.0
  %699 = vmatprep.subr.mxu0 0.0
  %700 = vmatpush1.msra.mxu0 0.0
  %701 = vmatprep.mubr.f32.mxu0 0.0
  %702 = vmatmul.mubr.f32.gmra.mrb[0].mxu0 %v635
  %v703 = vpop.f32.mrb[0].mxu0
  %v704 = vadd.f32 0.0, %v703
  %v705 = vpop.f32.mrb[0].mxu0
  %706 = vdwg.mxu0
  %v707 = vadd.f32 %v631, %v704
  %v708 = vxor.u32 %v707, 2147483648
  %v709 = vmul.f32 %v708, 1.442695
  %v710 = vpow.pop %v709
  %v711 = vadd.f32 %v710, 1.0
  %v712 = vrcp.pop %v711
  %v713 = vmul.f32 1.0, %v712
  %v714 = vtanh.pop %v707
  %v715 = vmul.f32 %v713, %v622
  %717 = vrot.lane.b32.xlu0 %v714, 64
  %v718 = vpop.permute.xlu0 %717
  %v720 = vmul.f32 %v713, %v718
  %722 = vrot.lane.b32.xlu0 %v720, 32
  %v723 = vpop.permute.xlu0 %722
  %v725 = vadd.f32 %v715, %v723
  %v726 = vtanh.pop %v725
  %728 = vrot.lane.b32.xlu0 %v726, 64
  %v729 = vpop.permute.xlu0 %728
  %v731 = vmul.f32 %v713, %v729
  %s732 = sadd.s32 %s29, 5
  %v733 = vstv %s732
  %vm734 = vcmp.lt.s32.totalorder %v733, %v24
  %v735 = vsel %vm734, 1, 0
  %736 = vset.pattern.permute.xlu0 0
  %737 = vperm.xlu0 %736, %v735
  %v738 = vpop.permute.xlu0 %737
  %vm739 = vcmp.eq.s32.totalorder %v738, 1
  %v740 = vsel %vm739, %v731, %v621
  %v741 = vsel %vm739, %v725, %v622
  %v742 = vsel %vm739, %v731, 0.0
  %744 = vrot.lane.b32.xlu0 %v742, 32
  %v745 = vpop.permute.xlu0 %744
  %s747 = scalar_lea.vmem %s3, 40
  %748 = vst.msk [vmem:[%s747] sm:$0xff] %vm33, %v745
  %s749 = scalar_lea.vmem %s1, 48
  %v750 = vld [vmem:[%s749] sm:$0xff]
  %752 = vrot.lane.b32.xlu0 %v740, 32
  %v753 = vpop.permute.xlu0 %752
  %v754 = vsel %vm33, %v753, 0
  %756 = vmatprep.subr.mxu0 0.0
  %757 = vmatpush1.msra.mxu0 %v25
  %758 = vmatprep.subr.mxu0 0.0
  %759 = vmatpush1.msra.mxu0 %v26
  %760 = vmatprep.subr.mxu0 0.0
  %761 = vmatpush1.msra.mxu0 %v27
  %762 = vmatprep.subr.mxu0 0.0
  %763 = vmatpush1.msra.mxu0 %v28
  %764 = vmatprep.subr.mxu0 0.0
  %765 = vmatpush1.msra.mxu0 0.0
  %766 = vmatprep.subr.mxu0 0.0
  %767 = vmatpush1.msra.mxu0 0.0
  %768 = vmatprep.subr.mxu0 0.0
  %769 = vmatpush1.msra.mxu0 0.0
  %770 = vmatprep.subr.mxu0 0.0
  %771 = vmatpush1.msra.mxu0 0.0
  %772 = vmatprep.subr.mxu0 0.0
  %773 = vmatpush1.msra.mxu0 0.0
  %774 = vmatprep.subr.mxu0 0.0
  %775 = vmatpush1.msra.mxu0 0.0
  %776 = vmatprep.subr.mxu0 0.0
  %777 = vmatpush1.msra.mxu0 0.0
  %778 = vmatprep.subr.mxu0 0.0
  %779 = vmatpush1.msra.mxu0 0.0
  %780 = vmatprep.subr.mxu0 0.0
  %781 = vmatpush1.msra.mxu0 0.0
  %782 = vmatprep.subr.mxu0 0.0
  %783 = vmatpush1.msra.mxu0 0.0
  %784 = vmatprep.subr.mxu0 0.0
  %785 = vmatpush1.msra.mxu0 0.0
  %786 = vmatprep.subr.mxu0 0.0
  %787 = vmatpush1.msra.mxu0 0.0
  %788 = vmatprep.subr.mxu0 0.0
  %789 = vmatpush1.msra.mxu0 0.0
  %790 = vmatprep.subr.mxu0 0.0
  %791 = vmatpush1.msra.mxu0 0.0
  %792 = vmatprep.subr.mxu0 0.0
  %793 = vmatpush1.msra.mxu0 0.0
  %794 = vmatprep.subr.mxu0 0.0
  %795 = vmatpush1.msra.mxu0 0.0
  %796 = vmatprep.subr.mxu0 0.0
  %797 = vmatpush1.msra.mxu0 0.0
  %798 = vmatprep.subr.mxu0 0.0
  %799 = vmatpush1.msra.mxu0 0.0
  %800 = vmatprep.subr.mxu0 0.0
  %801 = vmatpush1.msra.mxu0 0.0
  %802 = vmatprep.subr.mxu0 0.0
  %803 = vmatpush1.msra.mxu0 0.0
  %804 = vmatprep.subr.mxu0 0.0
  %805 = vmatpush1.msra.mxu0 0.0
  %806 = vmatprep.subr.mxu0 0.0
  %807 = vmatpush1.msra.mxu0 0.0
  %808 = vmatprep.subr.mxu0 0.0
  %809 = vmatpush1.msra.mxu0 0.0
  %810 = vmatprep.subr.mxu0 0.0
  %811 = vmatpush1.msra.mxu0 0.0
  %812 = vmatprep.subr.mxu0 0.0
  %813 = vmatpush1.msra.mxu0 0.0
  %814 = vmatprep.subr.mxu0 0.0
  %815 = vmatpush1.msra.mxu0 0.0
  %816 = vmatprep.subr.mxu0 0.0
  %817 = vmatpush1.msra.mxu0 0.0
  %818 = vmatprep.subr.mxu0 0.0
  %819 = vmatpush1.msra.mxu0 0.0
  %820 = vmatprep.mubr.f32.mxu0 0.0
  %821 = vmatmul.mubr.f32.gmra.mrb[0].mxu0 %v754
  %v822 = vpop.f32.mrb[0].mxu0
  %v823 = vadd.f32 0.0, %v822
  %v824 = vpop.f32.mrb[0].mxu0
  %825 = vdwg.mxu0
  %v826 = vadd.f32 %v750, %v823
  %v827 = vxor.u32 %v826, 2147483648
  %v828 = vmul.f32 %v827, 1.442695
  %v829 = vpow.pop %v828
  %v830 = vadd.f32 %v829, 1.0
  %v831 = vrcp.pop %v830
  %v832 = vmul.f32 1.0, %v831
  %v833 = vtanh.pop %v826
  %v834 = vmul.f32 %v832, %v741
  %836 = vrot.lane.b32.xlu0 %v833, 64
  %v837 = vpop.permute.xlu0 %836
  %v839 = vmul.f32 %v832, %v837
  %841 = vrot.lane.b32.xlu0 %v839, 32
  %v842 = vpop.permute.xlu0 %841
  %v844 = vadd.f32 %v834, %v842
  %v845 = vtanh.pop %v844
  %847 = vrot.lane.b32.xlu0 %v845, 64
  %v848 = vpop.permute.xlu0 %847
  %v850 = vmul.f32 %v832, %v848
  %s851 = sadd.s32 %s29, 6
  %v852 = vstv %s851
  %vm853 = vcmp.lt.s32.totalorder %v852, %v24
  %v854 = vsel %vm853, 1, 0
  %855 = vset.pattern.permute.xlu0 0
  %856 = vperm.xlu0 %855, %v854
  %v857 = vpop.permute.xlu0 %856
  %vm858 = vcmp.eq.s32.totalorder %v857, 1
  %v859 = vsel %vm858, %v850, %v740
  %v860 = vsel %vm858, %v844, %v741
  %v861 = vsel %vm858, %v850, 0.0
  %863 = vrot.lane.b32.xlu0 %v861, 32
  %v864 = vpop.permute.xlu0 %863
  %s866 = scalar_lea.vmem %s3, 48
  %867 = vst.msk [vmem:[%s866] sm:$0xff] %vm33, %v864
  %s868 = scalar_lea.vmem %s1, 56
  %v869 = vld [vmem:[%s868] sm:$0xff]
  %871 = vrot.lane.b32.xlu0 %v859, 32
  %v872 = vpop.permute.xlu0 %871
  %v873 = vsel %vm33, %v872, 0
  %875 = vmatprep.subr.mxu0 0.0
  %876 = vmatpush1.msra.mxu0 %v25
  %877 = vmatprep.subr.mxu0 0.0
  %878 = vmatpush1.msra.mxu0 %v26
  %879 = vmatprep.subr.mxu0 0.0
  %880 = vmatpush1.msra.mxu0 %v27
  %881 = vmatprep.subr.mxu0 0.0
  %882 = vmatpush1.msra.mxu0 %v28
  %883 = vmatprep.subr.mxu0 0.0
  %884 = vmatpush1.msra.mxu0 0.0
  %885 = vmatprep.subr.mxu0 0.0
  %886 = vmatpush1.msra.mxu0 0.0
  %887 = vmatprep.subr.mxu0 0.0
  %888 = vmatpush1.msra.mxu0 0.0
  %889 = vmatprep.subr.mxu0 0.0
  %890 = vmatpush1.msra.mxu0 0.0
  %891 = vmatprep.subr.mxu0 0.0
  %892 = vmatpush1.msra.mxu0 0.0
  %893 = vmatprep.subr.mxu0 0.0
  %894 = vmatpush1.msra.mxu0 0.0
  %895 = vmatprep.subr.mxu0 0.0
  %896 = vmatpush1.msra.mxu0 0.0
  %897 = vmatprep.subr.mxu0 0.0
  %898 = vmatpush1.msra.mxu0 0.0
  %899 = vmatprep.subr.mxu0 0.0
  %900 = vmatpush1.msra.mxu0 0.0
  %901 = vmatprep.subr.mxu0 0.0
  %902 = vmatpush1.msra.mxu0 0.0
  %903 = vmatprep.subr.mxu0 0.0
  %904 = vmatpush1.msra.mxu0 0.0
  %905 = vmatprep.subr.mxu0 0.0
  %906 = vmatpush1.msra.mxu0 0.0
  %907 = vmatprep.subr.mxu0 0.0
  %908 = vmatpush1.msra.mxu0 0.0
  %909 = vmatprep.subr.mxu0 0.0
  %910 = vmatpush1.msra.mxu0 0.0
  %911 = vmatprep.subr.mxu0 0.0
  %912 = vmatpush1.msra.mxu0 0.0
  %913 = vmatprep.subr.mxu0 0.0
  %914 = vmatpush1.msra.mxu0 0.0
  %915 = vmatprep.subr.mxu0 0.0
  %916 = vmatpush1.msra.mxu0 0.0
  %917 = vmatprep.subr.mxu0 0.0
  %918 = vmatpush1.msra.mxu0 0.0
  %919 = vmatprep.subr.mxu0 0.0
  %920 = vmatpush1.msra.mxu0 0.0
  %921 = vmatprep.subr.mxu0 0.0
  %922 = vmatpush1.msra.mxu0 0.0
  %923 = vmatprep.subr.mxu0 0.0
  %924 = vmatpush1.msra.mxu0 0.0
  %925 = vmatprep.subr.mxu0 0.0
  %926 = vmatpush1.msra.mxu0 0.0
  %927 = vmatprep.subr.mxu0 0.0
  %928 = vmatpush1.msra.mxu0 0.0
  %929 = vmatprep.subr.mxu0 0.0
  %930 = vmatpush1.msra.mxu0 0.0
  %931 = vmatprep.subr.mxu0 0.0
  %932 = vmatpush1.msra.mxu0 0.0
  %933 = vmatprep.subr.mxu0 0.0
  %934 = vmatpush1.msra.mxu0 0.0
  %935 = vmatprep.subr.mxu0 0.0
  %936 = vmatpush1.msra.mxu0 0.0
  %937 = vmatprep.subr.mxu0 0.0
  %938 = vmatpush1.msra.mxu0 0.0
  %939 = vmatprep.mubr.f32.mxu0 0.0
  %940 = vmatmul.mubr.f32.gmra.mrb[0].mxu0 %v873
  %v941 = vpop.f32.mrb[0].mxu0
  %v942 = vadd.f32 0.0, %v941
  %v943 = vpop.f32.mrb[0].mxu0
  %944 = vdwg.mxu0
  %v945 = vadd.f32 %v869, %v942
  %v946 = vxor.u32 %v945, 2147483648
  %v947 = vmul.f32 %v946, 1.442695
  %v948 = vpow.pop %v947
  %v949 = vadd.f32 %v948, 1.0
  %v950 = vrcp.pop %v949
  %v951 = vmul.f32 1.0, %v950
  %v952 = vtanh.pop %v945
  %v953 = vmul.f32 %v951, %v860
  %955 = vrot.lane.b32.xlu0 %v952, 64
  %v956 = vpop.permute.xlu0 %955
  %v958 = vmul.f32 %v951, %v956
  %960 = vrot.lane.b32.xlu0 %v958, 32
  %v961 = vpop.permute.xlu0 %960
  %v963 = vadd.f32 %v953, %v961
  %v964 = vtanh.pop %v963
  %966 = vrot.lane.b32.xlu0 %v964, 64
  %v967 = vpop.permute.xlu0 %966
  %v969 = vmul.f32 %v951, %v967
  %s970 = sadd.s32 %s29, 7
  %v971 = vstv %s970
  %vm972 = vcmp.lt.s32.totalorder %v971, %v24
  %v973 = vsel %vm972, 1, 0
  %974 = vset.pattern.permute.xlu0 0
  %975 = vperm.xlu0 %974, %v973
  %v976 = vpop.permute.xlu0 %975
  %vm977 = vcmp.eq.s32.totalorder %v976, 1
  %v978 = vsel %vm977, %v969, %v859
  %v979 = vsel %vm977, %v963, %v860
  %v980 = vsel %vm977, %v969, 0.0
  %982 = vrot.lane.b32.xlu0 %v980, 32
  %v983 = vpop.permute.xlu0 %982
  %s985 = scalar_lea.vmem %s3, 56
  %986 = vst.msk [vmem:[%s985] sm:$0xff] %vm33, %v983
  %988 = vrot.lane.b32.xlu0 %v978, 32
  %v989 = vpop.permute.xlu0 %988
  %991 = vst.msk [vmem:[#allocation2] sm:$0xff] %vm33, %v989
  %993 = vrot.lane.b32.xlu0 %v979, 96
  %v994 = vpop.permute.xlu0 %993
  %996 = vst.msk [vmem:[#allocation3] sm:$0xff] %vm33, %v994
  %997 = vst.msk [vmem:[%s4] sm:$0xff] %vm33, %v989
  %998 = vst.msk [vmem:[%s5] sm:$0xff] %vm33, %v994
  // Predicated region
  $region18: #{encoder_forward.1} parent=0 // pred_check
    _
  $region19: #{encoder_forward.1} parent=0 // pred_check_branch
    %1000 = sbr.rel (0) target = $region21
  $region20: #{encoder_forward.1} parent=0 // pred_region
    _
  $region21: #{encoder_forward.1} parent=0 // pred_fallthru
    _
  // Predicated region
  $region22: #{encoder_forward.1} parent=0 // pred_check
    _
  $region23: #{encoder_forward.1} parent=0 // pred_check_branch
    %1002 = sbr.rel (0) target = $region25
  $region24: #{encoder_forward.1} parent=0 // pred_region
    _
  $region25: #{encoder_forward.1} parent=0 // pred_fallthru
    _
  // Predicated region
  $region26: #{encoder_forward.1} parent=0 // pred_check
    _
  $region27: #{encoder_forward.1} parent=0 // pred_check_branch
    %1004 = sbr.rel (0) target = $region29
  $region28: #{encoder_forward.1} parent=0 // pred_region
    _
  $region29: #{encoder_forward.1} parent=0 // pred_fallthru
    _
  // Predicated region
  $region30: #{encoder_forward.1} parent=0 // pred_check
    _
  $region31: #{encoder_forward.1} parent=0 // pred_check_branch
    %1006 = sbr.rel (0) target = $region33
  $region32: #{encoder_forward.1} parent=0 // pred_region
    _
  $region33: #{encoder_forward.1} parent=0 // pred_fallthru
    _
  // Predicated region
  $region34: #{encoder_forward.1} parent=0 // pred_check
    _
  $region35: #{encoder_forward.1} parent=0 // pred_check_branch
    %1008 = sbr.rel (0) target = $region37
  $region36: #{encoder_forward.1} parent=0 // pred_region
    _
  $region37: #{encoder_forward.1} parent=0 // pred_fallthru
    _
  // Predicated region
  $region38: #{encoder_forward.1} parent=0 // pred_check
    _
  $region39: #{encoder_forward.1} parent=0 // pred_check_branch
    %1010 = sbr.rel (0) target = $region41
  $region40: #{encoder_forward.1} parent=0 // pred_region
    _
  $region41: #{encoder_forward.1} parent=0 // pred_fallthru
    _

</llo_original>
